<compile_context>
chip_gen: v7x
topology: tpu7x:2x2x1
jax: 0.10.0
libtpu: 0.0.40
codegen_flags: <defaults>
</compile_context>

<pallas_src>
import jax
import jax.numpy as jnp
from jax.experimental import pallas as pl
from jax.experimental.pallas import tpu as pltpu


def _round_up(x, m):
    return (x + m - 1) // m * m


def _make_char_rnn_kernel(C, S_T, E, H, OUT_W):
    G3 = 3 * H

    def kernel(emb_ref, clen_ref, wmask_ref,
               wi_ref, bi_ref, whf_ref, whb_ref, bhf_ref, bhb_ref,
               out_ref):
        # ---- batched input projection: one MXU matmul for all chars, both
        #      directions, all gates (gate order r, z, n per direction). ----
        x = emb_ref[...].reshape(C * S_T, E)            # layout-trivial (S_T % 8 == 0)
        gi = jnp.dot(x, wi_ref[...], preferred_element_type=jnp.float32)
        gi = (gi + bi_ref[...]).reshape(C, S_T, 2 * G3)  # (C, S_T, 6H)

        lens = clen_ref[...]                             # (S_T, 1) int32
        whf = whf_ref[...]
        whb = whb_ref[...]
        bhf = bhf_ref[...]
        bhb = bhb_ref[...]
        mm_dtype = whf.dtype

        h_f = jnp.zeros((S_T, H), jnp.float32)
        h_b = jnp.zeros((S_T, H), jnp.float32)

        # ---- fully-unrolled, direction-interleaved recurrence ----
        for t in range(C):
            tb = C - 1 - t
            gi_f = gi[t, :, 0:G3]                        # (S_T, 3H)
            gi_b = gi[tb, :, G3:2 * G3]

            gh_f = jnp.dot(h_f.astype(mm_dtype), whf,
                           preferred_element_type=jnp.float32) + bhf
            gh_b = jnp.dot(h_b.astype(mm_dtype), whb,
                           preferred_element_type=jnp.float32) + bhb

            # forward direction (processes char position t)
            r_f = jax.nn.sigmoid(gi_f[:, 0:H] + gh_f[:, 0:H])
            z_f = jax.nn.sigmoid(gi_f[:, H:2 * H] + gh_f[:, H:2 * H])
            n_f = jnp.tanh(gi_f[:, 2 * H:G3] + r_f * gh_f[:, 2 * H:G3])
            hf_new = n_f + z_f * (h_f - n_f)             # == (1-z)*n + z*h
            m_f = (lens > t).astype(jnp.float32)         # freeze past char len
            h_f = h_f + m_f * (hf_new - h_f)

            # backward direction (processes char position C-1-t)
            r_b = jax.nn.sigmoid(gi_b[:, 0:H] + gh_b[:, 0:H])
            z_b = jax.nn.sigmoid(gi_b[:, H:2 * H] + gh_b[:, H:2 * H])
            n_b = jnp.tanh(gi_b[:, 2 * H:G3] + r_b * gh_b[:, 2 * H:G3])
            hb_new = n_b + z_b * (h_b - n_b)
            m_b = (lens > tb).astype(jnp.float32)
            h_b = h_b + m_b * (hb_new - h_b)

        wm = wmask_ref[...]                              # (S_T, 1) word mask
        parts = [h_f, h_b]
        if OUT_W > 2 * H:
            parts.append(jnp.zeros((S_T, OUT_W - 2 * H), jnp.float32))
        out_ref[...] = (jnp.concatenate(parts, axis=-1) * wm).astype(out_ref.dtype)

    return kernel


def char_rnn_forward(chars, chars_mask, data_mask, params,
                     compute_dtype=jnp.bfloat16):
    """chars: (B,S,C) int, chars_mask: (B,S,C), data_mask: (B,S) -> (B,S,2H)."""
    B, S, C = chars.shape
    E = params["embed"].shape[1]
    H = params["wh_f"].shape[-1]
    G3 = 3 * H

    S_T = min(_round_up(S, 8), 128)        # words per block (multiple of 8)
    S_pad = _round_up(S, S_T)
    OUT_W = _round_up(2 * H, 128)          # lane-dense output width

    # --- glue on small int/mask tensors only (no big-tensor HBM transpose) ---
    chars_t = jnp.transpose(chars, (0, 2, 1))                         # (B,C,S)
    chars_t = jnp.pad(chars_t, ((0, 0), (0, 0), (0, S_pad - S)))
    clens = jnp.sum(chars_mask, axis=-1).astype(jnp.int32)            # (B,S)
    clens = jnp.pad(clens, ((0, 0), (0, S_pad - S)))[..., None]       # (B,S_pad,1)
    wmask = jnp.pad(data_mask.astype(jnp.float32),
                    ((0, 0), (0, S_pad - S)))[..., None]              # (B,S_pad,1)

    # embedding gather directly in (B, C, S_pad, E), MXU dtype
    emb = params["embed"].astype(compute_dtype)[chars_t]              # (B,C,S_pad,E)

    # gate-fused weights: columns = [r, z, n] per direction
    def fuse(w):   # (3, K, H) -> (K, 3H)
        return jnp.transpose(w, (1, 0, 2)).reshape(w.shape[1], G3)

    wi_all = jnp.concatenate([fuse(params["wi_f"]), fuse(params["wi_b"])],
                             axis=-1).astype(compute_dtype)            # (E, 6H)
    bi_all = jnp.concatenate([fuse(params["bi_f"]), fuse(params["bi_b"])],
                             axis=-1).astype(jnp.float32)              # (1, 6H)
    wh_f = fuse(params["wh_f"]).astype(compute_dtype)                  # (H, 3H)
    wh_b = fuse(params["wh_b"]).astype(compute_dtype)
    bh_f = fuse(params["bh_f"]).astype(jnp.float32)                    # (1, 3H)
    bh_b = fuse(params["bh_b"]).astype(jnp.float32)

    kernel = _make_char_rnn_kernel(C, S_T, E, H, OUT_W)
    const = lambda b, s: (0, 0)

    out = pl.pallas_call(
        kernel,
        out_shape=jax.ShapeDtypeStruct((B, S_pad, OUT_W), jnp.float32),
        grid=(B, S_pad // S_T),
        in_specs=[
            pl.BlockSpec((None, C, S_T, E), lambda b, s: (b, 0, s, 0)),   # emb
            pl.BlockSpec((None, S_T, 1), lambda b, s: (b, s, 0)),         # char lens
            pl.BlockSpec((None, S_T, 1), lambda b, s: (b, s, 0)),         # word mask
            pl.BlockSpec((E, 2 * G3), const),                             # W_ih fwd+bwd
            pl.BlockSpec((1, 2 * G3), const),                             # b_ih fwd+bwd
            pl.BlockSpec((H, G3), const),                                 # W_hh fwd
            pl.BlockSpec((H, G3), const),                                 # W_hh bwd
            pl.BlockSpec((1, G3), const),                                 # b_hh fwd
            pl.BlockSpec((1, G3), const),                                 # b_hh bwd
        ],
        out_specs=pl.BlockSpec((None, S_T, OUT_W), lambda b, s: (b, s, 0)),
        compiler_params=pltpu.CompilerParams(
            dimension_semantics=("parallel", "parallel")),
    )(emb, clens, wmask, wi_all, bi_all, wh_f, wh_b, bh_f, bh_b)

    return out[:, :S, : 2 * H]


def init_params(key, vocab_size, embed_dim, hidden_size):
    ks = jax.random.split(key, 10)
    s = float(1.0 / (hidden_size ** 0.5))
    u = lambda k, shape: jax.random.uniform(k, shape, jnp.float32, -s, s)
    return {
        "embed": jax.random.normal(ks[0], (vocab_size, embed_dim), jnp.float32),
        # gate-stacked, pre-transposed weights: (gate, in, hidden), gates (r,z,n)
        "wi_f": u(ks[1], (3, embed_dim, hidden_size)),
        "wh_f": u(ks[2], (3, hidden_size, hidden_size)),
        "bi_f": u(ks[3], (3, 1, hidden_size)),
        "bh_f": u(ks[4], (3, 1, hidden_size)),
        "wi_b": u(ks[5], (3, embed_dim, hidden_size)),
        "wh_b": u(ks[6], (3, hidden_size, hidden_size)),
        "bi_b": u(ks[7], (3, 1, hidden_size)),
        "bh_b": u(ks[8], (3, 1, hidden_size)),
    }


def reference_forward(chars, chars_mask, data_mask, p):
    """Pure-JAX f32 reference with identical GRU / masking semantics."""
    emb = p["embed"][chars].astype(jnp.float32)            # (B,S,C,E)
    cm = chars_mask.astype(jnp.float32)[..., None]         # (B,S,C,1)
    B, S, C, E = emb.shape
    H = p["wh_f"].shape[-1]

    def run_dir(wi, wh, bi, bh, reverse):
        h = jnp.zeros((B, S, H), jnp.float32)
        order = range(C - 1, -1, -1) if reverse else range(C)
        for t in order:
            x = emb[:, :, t, :]
            m = cm[:, :, t, :]
            r = jax.nn.sigmoid(x @ wi[0] + bi[0] + h @ wh[0] + bh[0])
            z = jax.nn.sigmoid(x @ wi[1] + bi[1] + h @ wh[1] + bh[1])
            n = jnp.tanh(x @ wi[2] + bi[2] + r * (h @ wh[2] + bh[2]))
            h_new = (1.0 - z) * n + z * h
            h = m * h_new + (1.0 - m) * h
        return h

    h_f = run_dir(p["wi_f"], p["wh_f"], p["bi_f"], p["bh_f"], False)
    h_b = run_dir(p["wi_b"], p["wh_b"], p["bi_b"], p["bh_b"], True)
    return jnp.concatenate([h_f, h_b], -1) * data_mask.astype(jnp.float32)[..., None]


if __name__ == "__main__":
    B, S, C = 2, 8, 6          # batch, seq_len (words), chars per word
    vocab, E, H = 20, 8, 16    # vocab_size, embed_dim, hidden_size

    key = jax.random.PRNGKey(0)
    kp, kc, kl = jax.random.split(key, 3)

    params = init_params(kp, vocab, E, H)

    chars = jax.random.randint(kc, (B, S, C), 0, vocab, dtype=jnp.int32)
    char_lens = jax.random.randint(kl, (B, S), 1, C + 1, dtype=jnp.int32)
    chars_mask = (jnp.arange(C)[None, None, :] < char_lens[..., None]).astype(jnp.int32)
    word_lens = jnp.array([S - 2, S], dtype=jnp.int32)
    data_mask = (jnp.arange(S)[None, :] < word_lens[:, None]).astype(jnp.int32)

    ref = reference_forward(chars, chars_mask, data_mask, params)

    # f32 MXU inputs: tight check of GRU / packed-sequence semantics.
    out_f32 = jax.block_until_ready(
        char_rnn_forward(chars, chars_mask, data_mask, params,
                         compute_dtype=jnp.float32))
    assert out_f32.shape == (B, S, 2 * H), out_f32.shape
    err_f32 = float(jnp.max(jnp.abs(out_f32 - ref)))
    assert err_f32 < 1e-3, f"f32 max abs error {err_f32}"

    # bf16 MXU inputs (v6e/v7x fast path), f32 accumulation + f32 gate math.
    out_bf16 = jax.block_until_ready(
        char_rnn_forward(chars, chars_mask, data_mask, params,
                         compute_dtype=jnp.bfloat16))
    err_bf16 = float(jnp.max(jnp.abs(out_bf16 - ref)))
    assert err_bf16 < 5e-2, f"bf16 max abs error {err_bf16}"

    print("KERNEL_OK")
</pallas_src>

<mosaic_0001>
module attributes {stable_mosaic.version = 11 : i64} {
  func.func @kernel(%arg0: i32, %arg1: i32, %arg2: memref<1x6x8x8xf32, #tpu.memory_space<vmem>>, %arg3: memref<1x8x1xi32, #tpu.memory_space<vmem>>, %arg4: memref<1x8x1xf32, #tpu.memory_space<vmem>>, %arg5: memref<8x96xf32, #tpu.memory_space<vmem>>, %arg6: memref<1x96xf32, #tpu.memory_space<vmem>>, %arg7: memref<16x48xf32, #tpu.memory_space<vmem>>, %arg8: memref<16x48xf32, #tpu.memory_space<vmem>>, %arg9: memref<1x48xf32, #tpu.memory_space<vmem>>, %arg10: memref<1x48xf32, #tpu.memory_space<vmem>>, %arg11: memref<1x8x128xf32, #tpu.memory_space<vmem>>) attributes {dimension_semantics = [#tpu.dimension_semantics<parallel>, #tpu.dimension_semantics<parallel>], iteration_bounds = array<i64: 2, 1>, scalar_prefetch = 0 : i64, scratch_operands = 0 : i64, tpu.core_type = #tpu.core_type<tc>, window_params = [{transform_indices = @transform_0, window_bounds = array<i64: 1, 6, 8, 8>}, {transform_indices = @transform_1, window_bounds = array<i64: 1, 8, 1>}, {transform_indices = @transform_2, window_bounds = array<i64: 1, 8, 1>}, {pipeline_mode = #tpu.pipeline_mode<synchronous>, transform_indices = @transform_3, window_bounds = array<i64: 8, 96>}, {pipeline_mode = #tpu.pipeline_mode<synchronous>, transform_indices = @transform_4, window_bounds = array<i64: 1, 96>}, {pipeline_mode = #tpu.pipeline_mode<synchronous>, transform_indices = @transform_5, window_bounds = array<i64: 16, 48>}, {pipeline_mode = #tpu.pipeline_mode<synchronous>, transform_indices = @transform_6, window_bounds = array<i64: 16, 48>}, {pipeline_mode = #tpu.pipeline_mode<synchronous>, transform_indices = @transform_7, window_bounds = array<i64: 1, 48>}, {pipeline_mode = #tpu.pipeline_mode<synchronous>, transform_indices = @transform_8, window_bounds = array<i64: 1, 48>}, {transform_indices = @transform_9, window_bounds = array<i64: 1, 8, 128>}]} {
    %c0 = arith.constant 0 : index
    %c0_0 = arith.constant 0 : index
    %c0_1 = arith.constant 0 : index
    %c0_2 = arith.constant 0 : index
    %0 = vector.load %arg2[%c0, %c0_0, %c0_1, %c0_2] : memref<1x6x8x8xf32, #tpu.memory_space<vmem>>, vector<1x6x8x8xf32>
    %1 = vector.shape_cast %0 : vector<1x6x8x8xf32> to vector<6x8x8xf32>
    %2 = vector.shape_cast %1 : vector<6x8x8xf32> to vector<48x8xf32>
    %c0_3 = arith.constant 0 : index
    %c0_4 = arith.constant 0 : index
    %3 = vector.load %arg5[%c0_3, %c0_4] : memref<8x96xf32, #tpu.memory_space<vmem>>, vector<8x96xf32>
    %cst = arith.constant dense<0.000000e+00> : vector<48x96xf32>
    %4 = tpu.matmul %2, %3, %cst {dimension_numbers = #tpu.dot_dimension_numbers<[1], [0], [0], [1], [0, 0, 1, 1], [], []>} : vector<48x8xf32>, vector<8x96xf32>, vector<48x96xf32> -> vector<48x96xf32>
    %c0_5 = arith.constant 0 : index
    %c0_6 = arith.constant 0 : index
    %5 = vector.load %arg6[%c0_5, %c0_6] : memref<1x96xf32, #tpu.memory_space<vmem>>, vector<1x96xf32>
    %6 = vector.broadcast %5 : vector<1x96xf32> to vector<48x96xf32>
    %7 = arith.addf %4, %6 : vector<48x96xf32>
    %8 = vector.shape_cast %7 : vector<48x96xf32> to vector<6x8x96xf32>
    %c0_7 = arith.constant 0 : index
    %c0_8 = arith.constant 0 : index
    %c0_9 = arith.constant 0 : index
    %9 = vector.load %arg3[%c0_7, %c0_8, %c0_9] : memref<1x8x1xi32, #tpu.memory_space<vmem>>, vector<1x8x1xi32>
    %10 = vector.shape_cast %9 : vector<1x8x1xi32> to vector<8x1xi32>
    %c0_10 = arith.constant 0 : index
    %c0_11 = arith.constant 0 : index
    %11 = vector.load %arg7[%c0_10, %c0_11] : memref<16x48xf32, #tpu.memory_space<vmem>>, vector<16x48xf32>
    %c0_12 = arith.constant 0 : index
    %c0_13 = arith.constant 0 : index
    %12 = vector.load %arg8[%c0_12, %c0_13] : memref<16x48xf32, #tpu.memory_space<vmem>>, vector<16x48xf32>
    %c0_14 = arith.constant 0 : index
    %c0_15 = arith.constant 0 : index
    %13 = vector.load %arg9[%c0_14, %c0_15] : memref<1x48xf32, #tpu.memory_space<vmem>>, vector<1x48xf32>
    %c0_16 = arith.constant 0 : index
    %c0_17 = arith.constant 0 : index
    %14 = vector.load %arg10[%c0_16, %c0_17] : memref<1x48xf32, #tpu.memory_space<vmem>>, vector<1x48xf32>
    %cst_18 = arith.constant 0.000000e+00 : f32
    %15 = vector.broadcast %cst_18 : f32 to vector<8x16xf32>
    %cst_19 = arith.constant 0.000000e+00 : f32
    %16 = vector.broadcast %cst_19 : f32 to vector<8x16xf32>
    %17 = vector.extract_strided_slice %8 {offsets = [0, 0, 0], sizes = [1, 8, 48], strides = [1, 1, 1]} : vector<6x8x96xf32> to vector<1x8x48xf32>
    %18 = vector.shape_cast %17 : vector<1x8x48xf32> to vector<8x48xf32>
    %19 = vector.extract_strided_slice %8 {offsets = [5, 0, 48], sizes = [1, 8, 48], strides = [1, 1, 1]} : vector<6x8x96xf32> to vector<1x8x48xf32>
    %20 = vector.shape_cast %19 : vector<1x8x48xf32> to vector<8x48xf32>
    %cst_20 = arith.constant dense<0.000000e+00> : vector<8x48xf32>
    %21 = tpu.matmul %15, %11, %cst_20 {dimension_numbers = #tpu.dot_dimension_numbers<[1], [0], [0], [1], [0, 0, 1, 1], [], []>} : vector<8x16xf32>, vector<16x48xf32>, vector<8x48xf32> -> vector<8x48xf32>
    %22 = vector.broadcast %13 : vector<1x48xf32> to vector<8x48xf32>
    %23 = arith.addf %21, %22 : vector<8x48xf32>
    %cst_21 = arith.constant dense<0.000000e+00> : vector<8x48xf32>
    %24 = tpu.matmul %16, %12, %cst_21 {dimension_numbers = #tpu.dot_dimension_numbers<[1], [0], [0], [1], [0, 0, 1, 1], [], []>} : vector<8x16xf32>, vector<16x48xf32>, vector<8x48xf32> -> vector<8x48xf32>
    %25 = vector.broadcast %14 : vector<1x48xf32> to vector<8x48xf32>
    %26 = arith.addf %24, %25 : vector<8x48xf32>
    %27 = vector.extract_strided_slice %18 {offsets = [0, 0], sizes = [8, 16], strides = [1, 1]} : vector<8x48xf32> to vector<8x16xf32>
    %28 = vector.extract_strided_slice %23 {offsets = [0, 0], sizes = [8, 16], strides = [1, 1]} : vector<8x48xf32> to vector<8x16xf32>
    %29 = arith.addf %27, %28 : vector<8x16xf32>
    %30 = arith.negf %29 : vector<8x16xf32>
    %31 = math.exp %30 : vector<8x16xf32>
    %cst_22 = arith.constant 1.000000e+00 : f32
    %32 = vector.broadcast %cst_22 : f32 to vector<8x16xf32>
    %33 = arith.addf %32, %31 : vector<8x16xf32>
    %34 = arith.divf %32, %33 : vector<8x16xf32>
    %35 = vector.extract_strided_slice %18 {offsets = [0, 16], sizes = [8, 16], strides = [1, 1]} : vector<8x48xf32> to vector<8x16xf32>
    %36 = vector.extract_strided_slice %23 {offsets = [0, 16], sizes = [8, 16], strides = [1, 1]} : vector<8x48xf32> to vector<8x16xf32>
    %37 = arith.addf %35, %36 : vector<8x16xf32>
    %38 = arith.negf %37 : vector<8x16xf32>
    %39 = math.exp %38 : vector<8x16xf32>
    %cst_23 = arith.constant 1.000000e+00 : f32
    %40 = vector.broadcast %cst_23 : f32 to vector<8x16xf32>
    %41 = arith.addf %40, %39 : vector<8x16xf32>
    %42 = arith.divf %40, %41 : vector<8x16xf32>
    %43 = vector.extract_strided_slice %18 {offsets = [0, 32], sizes = [8, 16], strides = [1, 1]} : vector<8x48xf32> to vector<8x16xf32>
    %44 = vector.extract_strided_slice %23 {offsets = [0, 32], sizes = [8, 16], strides = [1, 1]} : vector<8x48xf32> to vector<8x16xf32>
    %45 = arith.mulf %34, %44 : vector<8x16xf32>
    %46 = arith.addf %43, %45 : vector<8x16xf32>
    %47 = math.tanh %46 : vector<8x16xf32>
    %48 = arith.subf %15, %47 : vector<8x16xf32>
    %49 = arith.mulf %42, %48 : vector<8x16xf32>
    %50 = arith.addf %47, %49 : vector<8x16xf32>
    %c0_i32 = arith.constant 0 : i32
    %51 = vector.broadcast %c0_i32 : i32 to vector<8x1xi32>
    %52 = arith.cmpi sgt, %10, %51 : vector<8x1xi32>
    %53 = arith.extui %52 : vector<8x1xi1> to vector<8x1xi32>
    %54 = arith.sitofp %53 : vector<8x1xi32> to vector<8x1xf32>
    %55 = arith.subf %50, %15 : vector<8x16xf32>
    %56 = vector.broadcast %54 : vector<8x1xf32> to vector<8x16xf32>
    %57 = arith.mulf %56, %55 : vector<8x16xf32>
    %58 = arith.addf %15, %57 : vector<8x16xf32>
    %59 = vector.extract_strided_slice %20 {offsets = [0, 0], sizes = [8, 16], strides = [1, 1]} : vector<8x48xf32> to vector<8x16xf32>
    %60 = vector.extract_strided_slice %26 {offsets = [0, 0], sizes = [8, 16], strides = [1, 1]} : vector<8x48xf32> to vector<8x16xf32>
    %61 = arith.addf %59, %60 : vector<8x16xf32>
    %62 = arith.negf %61 : vector<8x16xf32>
    %63 = math.exp %62 : vector<8x16xf32>
    %cst_24 = arith.constant 1.000000e+00 : f32
    %64 = vector.broadcast %cst_24 : f32 to vector<8x16xf32>
    %65 = arith.addf %64, %63 : vector<8x16xf32>
    %66 = arith.divf %64, %65 : vector<8x16xf32>
    %67 = vector.extract_strided_slice %20 {offsets = [0, 16], sizes = [8, 16], strides = [1, 1]} : vector<8x48xf32> to vector<8x16xf32>
    %68 = vector.extract_strided_slice %26 {offsets = [0, 16], sizes = [8, 16], strides = [1, 1]} : vector<8x48xf32> to vector<8x16xf32>
    %69 = arith.addf %67, %68 : vector<8x16xf32>
    %70 = arith.negf %69 : vector<8x16xf32>
    %71 = math.exp %70 : vector<8x16xf32>
    %cst_25 = arith.constant 1.000000e+00 : f32
    %72 = vector.broadcast %cst_25 : f32 to vector<8x16xf32>
    %73 = arith.addf %72, %71 : vector<8x16xf32>
    %74 = arith.divf %72, %73 : vector<8x16xf32>
    %75 = vector.extract_strided_slice %20 {offsets = [0, 32], sizes = [8, 16], strides = [1, 1]} : vector<8x48xf32> to vector<8x16xf32>
    %76 = vector.extract_strided_slice %26 {offsets = [0, 32], sizes = [8, 16], strides = [1, 1]} : vector<8x48xf32> to vector<8x16xf32>
    %77 = arith.mulf %66, %76 : vector<8x16xf32>
    %78 = arith.addf %75, %77 : vector<8x16xf32>
    %79 = math.tanh %78 : vector<8x16xf32>
    %80 = arith.subf %16, %79 : vector<8x16xf32>
    %81 = arith.mulf %74, %80 : vector<8x16xf32>
    %82 = arith.addf %79, %81 : vector<8x16xf32>
    %c5_i32 = arith.constant 5 : i32
    %83 = vector.broadcast %c5_i32 : i32 to vector<8x1xi32>
    %84 = arith.cmpi sgt, %10, %83 : vector<8x1xi32>
    %85 = arith.extui %84 : vector<8x1xi1> to vector<8x1xi32>
    %86 = arith.sitofp %85 : vector<8x1xi32> to vector<8x1xf32>
    %87 = arith.subf %82, %16 : vector<8x16xf32>
    %88 = vector.broadcast %86 : vector<8x1xf32> to vector<8x16xf32>
    %89 = arith.mulf %88, %87 : vector<8x16xf32>
    %90 = arith.addf %16, %89 : vector<8x16xf32>
    %91 = vector.extract_strided_slice %8 {offsets = [1, 0, 0], sizes = [1, 8, 48], strides = [1, 1, 1]} : vector<6x8x96xf32> to vector<1x8x48xf32>
    %92 = vector.shape_cast %91 : vector<1x8x48xf32> to vector<8x48xf32>
    %93 = vector.extract_strided_slice %8 {offsets = [4, 0, 48], sizes = [1, 8, 48], strides = [1, 1, 1]} : vector<6x8x96xf32> to vector<1x8x48xf32>
    %94 = vector.shape_cast %93 : vector<1x8x48xf32> to vector<8x48xf32>
    %cst_26 = arith.constant dense<0.000000e+00> : vector<8x48xf32>
    %95 = tpu.matmul %58, %11, %cst_26 {dimension_numbers = #tpu.dot_dimension_numbers<[1], [0], [0], [1], [0, 0, 1, 1], [], []>} : vector<8x16xf32>, vector<16x48xf32>, vector<8x48xf32> -> vector<8x48xf32>
    %96 = vector.broadcast %13 : vector<1x48xf32> to vector<8x48xf32>
    %97 = arith.addf %95, %96 : vector<8x48xf32>
    %cst_27 = arith.constant dense<0.000000e+00> : vector<8x48xf32>
    %98 = tpu.matmul %90, %12, %cst_27 {dimension_numbers = #tpu.dot_dimension_numbers<[1], [0], [0], [1], [0, 0, 1, 1], [], []>} : vector<8x16xf32>, vector<16x48xf32>, vector<8x48xf32> -> vector<8x48xf32>
    %99 = vector.broadcast %14 : vector<1x48xf32> to vector<8x48xf32>
    %100 = arith.addf %98, %99 : vector<8x48xf32>
    %101 = vector.extract_strided_slice %92 {offsets = [0, 0], sizes = [8, 16], strides = [1, 1]} : vector<8x48xf32> to vector<8x16xf32>
    %102 = vector.extract_strided_slice %97 {offsets = [0, 0], sizes = [8, 16], strides = [1, 1]} : vector<8x48xf32> to vector<8x16xf32>
    %103 = arith.addf %101, %102 : vector<8x16xf32>
    %104 = arith.negf %103 : vector<8x16xf32>
    %105 = math.exp %104 : vector<8x16xf32>
    %cst_28 = arith.constant 1.000000e+00 : f32
    %106 = vector.broadcast %cst_28 : f32 to vector<8x16xf32>
    %107 = arith.addf %106, %105 : vector<8x16xf32>
    %108 = arith.divf %106, %107 : vector<8x16xf32>
    %109 = vector.extract_strided_slice %92 {offsets = [0, 16], sizes = [8, 16], strides = [1, 1]} : vector<8x48xf32> to vector<8x16xf32>
    %110 = vector.extract_strided_slice %97 {offsets = [0, 16], sizes = [8, 16], strides = [1, 1]} : vector<8x48xf32> to vector<8x16xf32>
    %111 = arith.addf %109, %110 : vector<8x16xf32>
    %112 = arith.negf %111 : vector<8x16xf32>
    %113 = math.exp %112 : vector<8x16xf32>
    %cst_29 = arith.constant 1.000000e+00 : f32
    %114 = vector.broadcast %cst_29 : f32 to vector<8x16xf32>
    %115 = arith.addf %114, %113 : vector<8x16xf32>
    %116 = arith.divf %114, %115 : vector<8x16xf32>
    %117 = vector.extract_strided_slice %92 {offsets = [0, 32], sizes = [8, 16], strides = [1, 1]} : vector<8x48xf32> to vector<8x16xf32>
    %118 = vector.extract_strided_slice %97 {offsets = [0, 32], sizes = [8, 16], strides = [1, 1]} : vector<8x48xf32> to vector<8x16xf32>
    %119 = arith.mulf %108, %118 : vector<8x16xf32>
    %120 = arith.addf %117, %119 : vector<8x16xf32>
    %121 = math.tanh %120 : vector<8x16xf32>
    %122 = arith.subf %58, %121 : vector<8x16xf32>
    %123 = arith.mulf %116, %122 : vector<8x16xf32>
    %124 = arith.addf %121, %123 : vector<8x16xf32>
    %c1_i32 = arith.constant 1 : i32
    %125 = vector.broadcast %c1_i32 : i32 to vector<8x1xi32>
    %126 = arith.cmpi sgt, %10, %125 : vector<8x1xi32>
    %127 = arith.extui %126 : vector<8x1xi1> to vector<8x1xi32>
    %128 = arith.sitofp %127 : vector<8x1xi32> to vector<8x1xf32>
    %129 = arith.subf %124, %58 : vector<8x16xf32>
    %130 = vector.broadcast %128 : vector<8x1xf32> to vector<8x16xf32>
    %131 = arith.mulf %130, %129 : vector<8x16xf32>
    %132 = arith.addf %58, %131 : vector<8x16xf32>
    %133 = vector.extract_strided_slice %94 {offsets = [0, 0], sizes = [8, 16], strides = [1, 1]} : vector<8x48xf32> to vector<8x16xf32>
    %134 = vector.extract_strided_slice %100 {offsets = [0, 0], sizes = [8, 16], strides = [1, 1]} : vector<8x48xf32> to vector<8x16xf32>
    %135 = arith.addf %133, %134 : vector<8x16xf32>
    %136 = arith.negf %135 : vector<8x16xf32>
    %137 = math.exp %136 : vector<8x16xf32>
    %cst_30 = arith.constant 1.000000e+00 : f32
    %138 = vector.broadcast %cst_30 : f32 to vector<8x16xf32>
    %139 = arith.addf %138, %137 : vector<8x16xf32>
    %140 = arith.divf %138, %139 : vector<8x16xf32>
    %141 = vector.extract_strided_slice %94 {offsets = [0, 16], sizes = [8, 16], strides = [1, 1]} : vector<8x48xf32> to vector<8x16xf32>
    %142 = vector.extract_strided_slice %100 {offsets = [0, 16], sizes = [8, 16], strides = [1, 1]} : vector<8x48xf32> to vector<8x16xf32>
    %143 = arith.addf %141, %142 : vector<8x16xf32>
    %144 = arith.negf %143 : vector<8x16xf32>
    %145 = math.exp %144 : vector<8x16xf32>
    %cst_31 = arith.constant 1.000000e+00 : f32
    %146 = vector.broadcast %cst_31 : f32 to vector<8x16xf32>
    %147 = arith.addf %146, %145 : vector<8x16xf32>
    %148 = arith.divf %146, %147 : vector<8x16xf32>
    %149 = vector.extract_strided_slice %94 {offsets = [0, 32], sizes = [8, 16], strides = [1, 1]} : vector<8x48xf32> to vector<8x16xf32>
    %150 = vector.extract_strided_slice %100 {offsets = [0, 32], sizes = [8, 16], strides = [1, 1]} : vector<8x48xf32> to vector<8x16xf32>
    %151 = arith.mulf %140, %150 : vector<8x16xf32>
    %152 = arith.addf %149, %151 : vector<8x16xf32>
    %153 = math.tanh %152 : vector<8x16xf32>
    %154 = arith.subf %90, %153 : vector<8x16xf32>
    %155 = arith.mulf %148, %154 : vector<8x16xf32>
    %156 = arith.addf %153, %155 : vector<8x16xf32>
    %c4_i32 = arith.constant 4 : i32
    %157 = vector.broadcast %c4_i32 : i32 to vector<8x1xi32>
    %158 = arith.cmpi sgt, %10, %157 : vector<8x1xi32>
    %159 = arith.extui %158 : vector<8x1xi1> to vector<8x1xi32>
    %160 = arith.sitofp %159 : vector<8x1xi32> to vector<8x1xf32>
    %161 = arith.subf %156, %90 : vector<8x16xf32>
    %162 = vector.broadcast %160 : vector<8x1xf32> to vector<8x16xf32>
    %163 = arith.mulf %162, %161 : vector<8x16xf32>
    %164 = arith.addf %90, %163 : vector<8x16xf32>
    %165 = vector.extract_strided_slice %8 {offsets = [2, 0, 0], sizes = [1, 8, 48], strides = [1, 1, 1]} : vector<6x8x96xf32> to vector<1x8x48xf32>
    %166 = vector.shape_cast %165 : vector<1x8x48xf32> to vector<8x48xf32>
    %167 = vector.extract_strided_slice %8 {offsets = [3, 0, 48], sizes = [1, 8, 48], strides = [1, 1, 1]} : vector<6x8x96xf32> to vector<1x8x48xf32>
    %168 = vector.shape_cast %167 : vector<1x8x48xf32> to vector<8x48xf32>
    %cst_32 = arith.constant dense<0.000000e+00> : vector<8x48xf32>
    %169 = tpu.matmul %132, %11, %cst_32 {dimension_numbers = #tpu.dot_dimension_numbers<[1], [0], [0], [1], [0, 0, 1, 1], [], []>} : vector<8x16xf32>, vector<16x48xf32>, vector<8x48xf32> -> vector<8x48xf32>
    %170 = vector.broadcast %13 : vector<1x48xf32> to vector<8x48xf32>
    %171 = arith.addf %169, %170 : vector<8x48xf32>
    %cst_33 = arith.constant dense<0.000000e+00> : vector<8x48xf32>
    %172 = tpu.matmul %164, %12, %cst_33 {dimension_numbers = #tpu.dot_dimension_numbers<[1], [0], [0], [1], [0, 0, 1, 1], [], []>} : vector<8x16xf32>, vector<16x48xf32>, vector<8x48xf32> -> vector<8x48xf32>
    %173 = vector.broadcast %14 : vector<1x48xf32> to vector<8x48xf32>
    %174 = arith.addf %172, %173 : vector<8x48xf32>
    %175 = vector.extract_strided_slice %166 {offsets = [0, 0], sizes = [8, 16], strides = [1, 1]} : vector<8x48xf32> to vector<8x16xf32>
    %176 = vector.extract_strided_slice %171 {offsets = [0, 0], sizes = [8, 16], strides = [1, 1]} : vector<8x48xf32> to vector<8x16xf32>
    %177 = arith.addf %175, %176 : vector<8x16xf32>
    %178 = arith.negf %177 : vector<8x16xf32>
    %179 = math.exp %178 : vector<8x16xf32>
    %cst_34 = arith.constant 1.000000e+00 : f32
    %180 = vector.broadcast %cst_34 : f32 to vector<8x16xf32>
    %181 = arith.addf %180, %179 : vector<8x16xf32>
    %182 = arith.divf %180, %181 : vector<8x16xf32>
    %183 = vector.extract_strided_slice %166 {offsets = [0, 16], sizes = [8, 16], strides = [1, 1]} : vector<8x48xf32> to vector<8x16xf32>
    %184 = vector.extract_strided_slice %171 {offsets = [0, 16], sizes = [8, 16], strides = [1, 1]} : vector<8x48xf32> to vector<8x16xf32>
    %185 = arith.addf %183, %184 : vector<8x16xf32>
    %186 = arith.negf %185 : vector<8x16xf32>
    %187 = math.exp %186 : vector<8x16xf32>
    %cst_35 = arith.constant 1.000000e+00 : f32
    %188 = vector.broadcast %cst_35 : f32 to vector<8x16xf32>
    %189 = arith.addf %188, %187 : vector<8x16xf32>
    %190 = arith.divf %188, %189 : vector<8x16xf32>
    %191 = vector.extract_strided_slice %166 {offsets = [0, 32], sizes = [8, 16], strides = [1, 1]} : vector<8x48xf32> to vector<8x16xf32>
    %192 = vector.extract_strided_slice %171 {offsets = [0, 32], sizes = [8, 16], strides = [1, 1]} : vector<8x48xf32> to vector<8x16xf32>
    %193 = arith.mulf %182, %192 : vector<8x16xf32>
    %194 = arith.addf %191, %193 : vector<8x16xf32>
    %195 = math.tanh %194 : vector<8x16xf32>
    %196 = arith.subf %132, %195 : vector<8x16xf32>
    %197 = arith.mulf %190, %196 : vector<8x16xf32>
    %198 = arith.addf %195, %197 : vector<8x16xf32>
    %c2_i32 = arith.constant 2 : i32
    %199 = vector.broadcast %c2_i32 : i32 to vector<8x1xi32>
    %200 = arith.cmpi sgt, %10, %199 : vector<8x1xi32>
    %201 = arith.extui %200 : vector<8x1xi1> to vector<8x1xi32>
    %202 = arith.sitofp %201 : vector<8x1xi32> to vector<8x1xf32>
    %203 = arith.subf %198, %132 : vector<8x16xf32>
    %204 = vector.broadcast %202 : vector<8x1xf32> to vector<8x16xf32>
    %205 = arith.mulf %204, %203 : vector<8x16xf32>
    %206 = arith.addf %132, %205 : vector<8x16xf32>
    %207 = vector.extract_strided_slice %168 {offsets = [0, 0], sizes = [8, 16], strides = [1, 1]} : vector<8x48xf32> to vector<8x16xf32>
    %208 = vector.extract_strided_slice %174 {offsets = [0, 0], sizes = [8, 16], strides = [1, 1]} : vector<8x48xf32> to vector<8x16xf32>
    %209 = arith.addf %207, %208 : vector<8x16xf32>
    %210 = arith.negf %209 : vector<8x16xf32>
    %211 = math.exp %210 : vector<8x16xf32>
    %cst_36 = arith.constant 1.000000e+00 : f32
    %212 = vector.broadcast %cst_36 : f32 to vector<8x16xf32>
    %213 = arith.addf %212, %211 : vector<8x16xf32>
    %214 = arith.divf %212, %213 : vector<8x16xf32>
    %215 = vector.extract_strided_slice %168 {offsets = [0, 16], sizes = [8, 16], strides = [1, 1]} : vector<8x48xf32> to vector<8x16xf32>
    %216 = vector.extract_strided_slice %174 {offsets = [0, 16], sizes = [8, 16], strides = [1, 1]} : vector<8x48xf32> to vector<8x16xf32>
    %217 = arith.addf %215, %216 : vector<8x16xf32>
    %218 = arith.negf %217 : vector<8x16xf32>
    %219 = math.exp %218 : vector<8x16xf32>
    %cst_37 = arith.constant 1.000000e+00 : f32
    %220 = vector.broadcast %cst_37 : f32 to vector<8x16xf32>
    %221 = arith.addf %220, %219 : vector<8x16xf32>
    %222 = arith.divf %220, %221 : vector<8x16xf32>
    %223 = vector.extract_strided_slice %168 {offsets = [0, 32], sizes = [8, 16], strides = [1, 1]} : vector<8x48xf32> to vector<8x16xf32>
    %224 = vector.extract_strided_slice %174 {offsets = [0, 32], sizes = [8, 16], strides = [1, 1]} : vector<8x48xf32> to vector<8x16xf32>
    %225 = arith.mulf %214, %224 : vector<8x16xf32>
    %226 = arith.addf %223, %225 : vector<8x16xf32>
    %227 = math.tanh %226 : vector<8x16xf32>
    %228 = arith.subf %164, %227 : vector<8x16xf32>
    %229 = arith.mulf %222, %228 : vector<8x16xf32>
    %230 = arith.addf %227, %229 : vector<8x16xf32>
    %c3_i32 = arith.constant 3 : i32
    %231 = vector.broadcast %c3_i32 : i32 to vector<8x1xi32>
    %232 = arith.cmpi sgt, %10, %231 : vector<8x1xi32>
    %233 = arith.extui %232 : vector<8x1xi1> to vector<8x1xi32>
    %234 = arith.sitofp %233 : vector<8x1xi32> to vector<8x1xf32>
    %235 = arith.subf %230, %164 : vector<8x16xf32>
    %236 = vector.broadcast %234 : vector<8x1xf32> to vector<8x16xf32>
    %237 = arith.mulf %236, %235 : vector<8x16xf32>
    %238 = arith.addf %164, %237 : vector<8x16xf32>
    %239 = vector.extract_strided_slice %8 {offsets = [3, 0, 0], sizes = [1, 8, 48], strides = [1, 1, 1]} : vector<6x8x96xf32> to vector<1x8x48xf32>
    %240 = vector.shape_cast %239 : vector<1x8x48xf32> to vector<8x48xf32>
    %241 = vector.extract_strided_slice %8 {offsets = [2, 0, 48], sizes = [1, 8, 48], strides = [1, 1, 1]} : vector<6x8x96xf32> to vector<1x8x48xf32>
    %242 = vector.shape_cast %241 : vector<1x8x48xf32> to vector<8x48xf32>
    %cst_38 = arith.constant dense<0.000000e+00> : vector<8x48xf32>
    %243 = tpu.matmul %206, %11, %cst_38 {dimension_numbers = #tpu.dot_dimension_numbers<[1], [0], [0], [1], [0, 0, 1, 1], [], []>} : vector<8x16xf32>, vector<16x48xf32>, vector<8x48xf32> -> vector<8x48xf32>
    %244 = vector.broadcast %13 : vector<1x48xf32> to vector<8x48xf32>
    %245 = arith.addf %243, %244 : vector<8x48xf32>
    %cst_39 = arith.constant dense<0.000000e+00> : vector<8x48xf32>
    %246 = tpu.matmul %238, %12, %cst_39 {dimension_numbers = #tpu.dot_dimension_numbers<[1], [0], [0], [1], [0, 0, 1, 1], [], []>} : vector<8x16xf32>, vector<16x48xf32>, vector<8x48xf32> -> vector<8x48xf32>
    %247 = vector.broadcast %14 : vector<1x48xf32> to vector<8x48xf32>
    %248 = arith.addf %246, %247 : vector<8x48xf32>
    %249 = vector.extract_strided_slice %240 {offsets = [0, 0], sizes = [8, 16], strides = [1, 1]} : vector<8x48xf32> to vector<8x16xf32>
    %250 = vector.extract_strided_slice %245 {offsets = [0, 0], sizes = [8, 16], strides = [1, 1]} : vector<8x48xf32> to vector<8x16xf32>
    %251 = arith.addf %249, %250 : vector<8x16xf32>
    %252 = arith.negf %251 : vector<8x16xf32>
    %253 = math.exp %252 : vector<8x16xf32>
    %cst_40 = arith.constant 1.000000e+00 : f32
    %254 = vector.broadcast %cst_40 : f32 to vector<8x16xf32>
    %255 = arith.addf %254, %253 : vector<8x16xf32>
    %256 = arith.divf %254, %255 : vector<8x16xf32>
    %257 = vector.extract_strided_slice %240 {offsets = [0, 16], sizes = [8, 16], strides = [1, 1]} : vector<8x48xf32> to vector<8x16xf32>
    %258 = vector.extract_strided_slice %245 {offsets = [0, 16], sizes = [8, 16], strides = [1, 1]} : vector<8x48xf32> to vector<8x16xf32>
    %259 = arith.addf %257, %258 : vector<8x16xf32>
    %260 = arith.negf %259 : vector<8x16xf32>
    %261 = math.exp %260 : vector<8x16xf32>
    %cst_41 = arith.constant 1.000000e+00 : f32
    %262 = vector.broadcast %cst_41 : f32 to vector<8x16xf32>
    %263 = arith.addf %262, %261 : vector<8x16xf32>
    %264 = arith.divf %262, %263 : vector<8x16xf32>
    %265 = vector.extract_strided_slice %240 {offsets = [0, 32], sizes = [8, 16], strides = [1, 1]} : vector<8x48xf32> to vector<8x16xf32>
    %266 = vector.extract_strided_slice %245 {offsets = [0, 32], sizes = [8, 16], strides = [1, 1]} : vector<8x48xf32> to vector<8x16xf32>
    %267 = arith.mulf %256, %266 : vector<8x16xf32>
    %268 = arith.addf %265, %267 : vector<8x16xf32>
    %269 = math.tanh %268 : vector<8x16xf32>
    %270 = arith.subf %206, %269 : vector<8x16xf32>
    %271 = arith.mulf %264, %270 : vector<8x16xf32>
    %272 = arith.addf %269, %271 : vector<8x16xf32>
    %c3_i32_42 = arith.constant 3 : i32
    %273 = vector.broadcast %c3_i32_42 : i32 to vector<8x1xi32>
    %274 = arith.cmpi sgt, %10, %273 : vector<8x1xi32>
    %275 = arith.extui %274 : vector<8x1xi1> to vector<8x1xi32>
    %276 = arith.sitofp %275 : vector<8x1xi32> to vector<8x1xf32>
    %277 = arith.subf %272, %206 : vector<8x16xf32>
    %278 = vector.broadcast %276 : vector<8x1xf32> to vector<8x16xf32>
    %279 = arith.mulf %278, %277 : vector<8x16xf32>
    %280 = arith.addf %206, %279 : vector<8x16xf32>
    %281 = vector.extract_strided_slice %242 {offsets = [0, 0], sizes = [8, 16], strides = [1, 1]} : vector<8x48xf32> to vector<8x16xf32>
    %282 = vector.extract_strided_slice %248 {offsets = [0, 0], sizes = [8, 16], strides = [1, 1]} : vector<8x48xf32> to vector<8x16xf32>
    %283 = arith.addf %281, %282 : vector<8x16xf32>
    %284 = arith.negf %283 : vector<8x16xf32>
    %285 = math.exp %284 : vector<8x16xf32>
    %cst_43 = arith.constant 1.000000e+00 : f32
    %286 = vector.broadcast %cst_43 : f32 to vector<8x16xf32>
    %287 = arith.addf %286, %285 : vector<8x16xf32>
    %288 = arith.divf %286, %287 : vector<8x16xf32>
    %289 = vector.extract_strided_slice %242 {offsets = [0, 16], sizes = [8, 16], strides = [1, 1]} : vector<8x48xf32> to vector<8x16xf32>
    %290 = vector.extract_strided_slice %248 {offsets = [0, 16], sizes = [8, 16], strides = [1, 1]} : vector<8x48xf32> to vector<8x16xf32>
    %291 = arith.addf %289, %290 : vector<8x16xf32>
    %292 = arith.negf %291 : vector<8x16xf32>
    %293 = math.exp %292 : vector<8x16xf32>
    %cst_44 = arith.constant 1.000000e+00 : f32
    %294 = vector.broadcast %cst_44 : f32 to vector<8x16xf32>
    %295 = arith.addf %294, %293 : vector<8x16xf32>
    %296 = arith.divf %294, %295 : vector<8x16xf32>
    %297 = vector.extract_strided_slice %242 {offsets = [0, 32], sizes = [8, 16], strides = [1, 1]} : vector<8x48xf32> to vector<8x16xf32>
    %298 = vector.extract_strided_slice %248 {offsets = [0, 32], sizes = [8, 16], strides = [1, 1]} : vector<8x48xf32> to vector<8x16xf32>
    %299 = arith.mulf %288, %298 : vector<8x16xf32>
    %300 = arith.addf %297, %299 : vector<8x16xf32>
    %301 = math.tanh %300 : vector<8x16xf32>
    %302 = arith.subf %238, %301 : vector<8x16xf32>
    %303 = arith.mulf %296, %302 : vector<8x16xf32>
    %304 = arith.addf %301, %303 : vector<8x16xf32>
    %c2_i32_45 = arith.constant 2 : i32
    %305 = vector.broadcast %c2_i32_45 : i32 to vector<8x1xi32>
    %306 = arith.cmpi sgt, %10, %305 : vector<8x1xi32>
    %307 = arith.extui %306 : vector<8x1xi1> to vector<8x1xi32>
    %308 = arith.sitofp %307 : vector<8x1xi32> to vector<8x1xf32>
    %309 = arith.subf %304, %238 : vector<8x16xf32>
    %310 = vector.broadcast %308 : vector<8x1xf32> to vector<8x16xf32>
    %311 = arith.mulf %310, %309 : vector<8x16xf32>
    %312 = arith.addf %238, %311 : vector<8x16xf32>
    %313 = vector.extract_strided_slice %8 {offsets = [4, 0, 0], sizes = [1, 8, 48], strides = [1, 1, 1]} : vector<6x8x96xf32> to vector<1x8x48xf32>
    %314 = vector.shape_cast %313 : vector<1x8x48xf32> to vector<8x48xf32>
    %315 = vector.extract_strided_slice %8 {offsets = [1, 0, 48], sizes = [1, 8, 48], strides = [1, 1, 1]} : vector<6x8x96xf32> to vector<1x8x48xf32>
    %316 = vector.shape_cast %315 : vector<1x8x48xf32> to vector<8x48xf32>
    %cst_46 = arith.constant dense<0.000000e+00> : vector<8x48xf32>
    %317 = tpu.matmul %280, %11, %cst_46 {dimension_numbers = #tpu.dot_dimension_numbers<[1], [0], [0], [1], [0, 0, 1, 1], [], []>} : vector<8x16xf32>, vector<16x48xf32>, vector<8x48xf32> -> vector<8x48xf32>
    %318 = vector.broadcast %13 : vector<1x48xf32> to vector<8x48xf32>
    %319 = arith.addf %317, %318 : vector<8x48xf32>
    %cst_47 = arith.constant dense<0.000000e+00> : vector<8x48xf32>
    %320 = tpu.matmul %312, %12, %cst_47 {dimension_numbers = #tpu.dot_dimension_numbers<[1], [0], [0], [1], [0, 0, 1, 1], [], []>} : vector<8x16xf32>, vector<16x48xf32>, vector<8x48xf32> -> vector<8x48xf32>
    %321 = vector.broadcast %14 : vector<1x48xf32> to vector<8x48xf32>
    %322 = arith.addf %320, %321 : vector<8x48xf32>
    %323 = vector.extract_strided_slice %314 {offsets = [0, 0], sizes = [8, 16], strides = [1, 1]} : vector<8x48xf32> to vector<8x16xf32>
    %324 = vector.extract_strided_slice %319 {offsets = [0, 0], sizes = [8, 16], strides = [1, 1]} : vector<8x48xf32> to vector<8x16xf32>
    %325 = arith.addf %323, %324 : vector<8x16xf32>
    %326 = arith.negf %325 : vector<8x16xf32>
    %327 = math.exp %326 : vector<8x16xf32>
    %cst_48 = arith.constant 1.000000e+00 : f32
    %328 = vector.broadcast %cst_48 : f32 to vector<8x16xf32>
    %329 = arith.addf %328, %327 : vector<8x16xf32>
    %330 = arith.divf %328, %329 : vector<8x16xf32>
    %331 = vector.extract_strided_slice %314 {offsets = [0, 16], sizes = [8, 16], strides = [1, 1]} : vector<8x48xf32> to vector<8x16xf32>
    %332 = vector.extract_strided_slice %319 {offsets = [0, 16], sizes = [8, 16], strides = [1, 1]} : vector<8x48xf32> to vector<8x16xf32>
    %333 = arith.addf %331, %332 : vector<8x16xf32>
    %334 = arith.negf %333 : vector<8x16xf32>
    %335 = math.exp %334 : vector<8x16xf32>
    %cst_49 = arith.constant 1.000000e+00 : f32
    %336 = vector.broadcast %cst_49 : f32 to vector<8x16xf32>
    %337 = arith.addf %336, %335 : vector<8x16xf32>
    %338 = arith.divf %336, %337 : vector<8x16xf32>
    %339 = vector.extract_strided_slice %314 {offsets = [0, 32], sizes = [8, 16], strides = [1, 1]} : vector<8x48xf32> to vector<8x16xf32>
    %340 = vector.extract_strided_slice %319 {offsets = [0, 32], sizes = [8, 16], strides = [1, 1]} : vector<8x48xf32> to vector<8x16xf32>
    %341 = arith.mulf %330, %340 : vector<8x16xf32>
    %342 = arith.addf %339, %341 : vector<8x16xf32>
    %343 = math.tanh %342 : vector<8x16xf32>
    %344 = arith.subf %280, %343 : vector<8x16xf32>
    %345 = arith.mulf %338, %344 : vector<8x16xf32>
    %346 = arith.addf %343, %345 : vector<8x16xf32>
    %c4_i32_50 = arith.constant 4 : i32
    %347 = vector.broadcast %c4_i32_50 : i32 to vector<8x1xi32>
    %348 = arith.cmpi sgt, %10, %347 : vector<8x1xi32>
    %349 = arith.extui %348 : vector<8x1xi1> to vector<8x1xi32>
    %350 = arith.sitofp %349 : vector<8x1xi32> to vector<8x1xf32>
    %351 = arith.subf %346, %280 : vector<8x16xf32>
    %352 = vector.broadcast %350 : vector<8x1xf32> to vector<8x16xf32>
    %353 = arith.mulf %352, %351 : vector<8x16xf32>
    %354 = arith.addf %280, %353 : vector<8x16xf32>
    %355 = vector.extract_strided_slice %316 {offsets = [0, 0], sizes = [8, 16], strides = [1, 1]} : vector<8x48xf32> to vector<8x16xf32>
    %356 = vector.extract_strided_slice %322 {offsets = [0, 0], sizes = [8, 16], strides = [1, 1]} : vector<8x48xf32> to vector<8x16xf32>
    %357 = arith.addf %355, %356 : vector<8x16xf32>
    %358 = arith.negf %357 : vector<8x16xf32>
    %359 = math.exp %358 : vector<8x16xf32>
    %cst_51 = arith.constant 1.000000e+00 : f32
    %360 = vector.broadcast %cst_51 : f32 to vector<8x16xf32>
    %361 = arith.addf %360, %359 : vector<8x16xf32>
    %362 = arith.divf %360, %361 : vector<8x16xf32>
    %363 = vector.extract_strided_slice %316 {offsets = [0, 16], sizes = [8, 16], strides = [1, 1]} : vector<8x48xf32> to vector<8x16xf32>
    %364 = vector.extract_strided_slice %322 {offsets = [0, 16], sizes = [8, 16], strides = [1, 1]} : vector<8x48xf32> to vector<8x16xf32>
    %365 = arith.addf %363, %364 : vector<8x16xf32>
    %366 = arith.negf %365 : vector<8x16xf32>
    %367 = math.exp %366 : vector<8x16xf32>
    %cst_52 = arith.constant 1.000000e+00 : f32
    %368 = vector.broadcast %cst_52 : f32 to vector<8x16xf32>
    %369 = arith.addf %368, %367 : vector<8x16xf32>
    %370 = arith.divf %368, %369 : vector<8x16xf32>
    %371 = vector.extract_strided_slice %316 {offsets = [0, 32], sizes = [8, 16], strides = [1, 1]} : vector<8x48xf32> to vector<8x16xf32>
    %372 = vector.extract_strided_slice %322 {offsets = [0, 32], sizes = [8, 16], strides = [1, 1]} : vector<8x48xf32> to vector<8x16xf32>
    %373 = arith.mulf %362, %372 : vector<8x16xf32>
    %374 = arith.addf %371, %373 : vector<8x16xf32>
    %375 = math.tanh %374 : vector<8x16xf32>
    %376 = arith.subf %312, %375 : vector<8x16xf32>
    %377 = arith.mulf %370, %376 : vector<8x16xf32>
    %378 = arith.addf %375, %377 : vector<8x16xf32>
    %c1_i32_53 = arith.constant 1 : i32
    %379 = vector.broadcast %c1_i32_53 : i32 to vector<8x1xi32>
    %380 = arith.cmpi sgt, %10, %379 : vector<8x1xi32>
    %381 = arith.extui %380 : vector<8x1xi1> to vector<8x1xi32>
    %382 = arith.sitofp %381 : vector<8x1xi32> to vector<8x1xf32>
    %383 = arith.subf %378, %312 : vector<8x16xf32>
    %384 = vector.broadcast %382 : vector<8x1xf32> to vector<8x16xf32>
    %385 = arith.mulf %384, %383 : vector<8x16xf32>
    %386 = arith.addf %312, %385 : vector<8x16xf32>
    %387 = vector.extract_strided_slice %8 {offsets = [5, 0, 0], sizes = [1, 8, 48], strides = [1, 1, 1]} : vector<6x8x96xf32> to vector<1x8x48xf32>
    %388 = vector.shape_cast %387 : vector<1x8x48xf32> to vector<8x48xf32>
    %389 = vector.extract_strided_slice %8 {offsets = [0, 0, 48], sizes = [1, 8, 48], strides = [1, 1, 1]} : vector<6x8x96xf32> to vector<1x8x48xf32>
    %390 = vector.shape_cast %389 : vector<1x8x48xf32> to vector<8x48xf32>
    %cst_54 = arith.constant dense<0.000000e+00> : vector<8x48xf32>
    %391 = tpu.matmul %354, %11, %cst_54 {dimension_numbers = #tpu.dot_dimension_numbers<[1], [0], [0], [1], [0, 0, 1, 1], [], []>} : vector<8x16xf32>, vector<16x48xf32>, vector<8x48xf32> -> vector<8x48xf32>
    %392 = vector.broadcast %13 : vector<1x48xf32> to vector<8x48xf32>
    %393 = arith.addf %391, %392 : vector<8x48xf32>
    %cst_55 = arith.constant dense<0.000000e+00> : vector<8x48xf32>
    %394 = tpu.matmul %386, %12, %cst_55 {dimension_numbers = #tpu.dot_dimension_numbers<[1], [0], [0], [1], [0, 0, 1, 1], [], []>} : vector<8x16xf32>, vector<16x48xf32>, vector<8x48xf32> -> vector<8x48xf32>
    %395 = vector.broadcast %14 : vector<1x48xf32> to vector<8x48xf32>
    %396 = arith.addf %394, %395 : vector<8x48xf32>
    %397 = vector.extract_strided_slice %388 {offsets = [0, 0], sizes = [8, 16], strides = [1, 1]} : vector<8x48xf32> to vector<8x16xf32>
    %398 = vector.extract_strided_slice %393 {offsets = [0, 0], sizes = [8, 16], strides = [1, 1]} : vector<8x48xf32> to vector<8x16xf32>
    %399 = arith.addf %397, %398 : vector<8x16xf32>
    %400 = arith.negf %399 : vector<8x16xf32>
    %401 = math.exp %400 : vector<8x16xf32>
    %cst_56 = arith.constant 1.000000e+00 : f32
    %402 = vector.broadcast %cst_56 : f32 to vector<8x16xf32>
    %403 = arith.addf %402, %401 : vector<8x16xf32>
    %404 = arith.divf %402, %403 : vector<8x16xf32>
    %405 = vector.extract_strided_slice %388 {offsets = [0, 16], sizes = [8, 16], strides = [1, 1]} : vector<8x48xf32> to vector<8x16xf32>
    %406 = vector.extract_strided_slice %393 {offsets = [0, 16], sizes = [8, 16], strides = [1, 1]} : vector<8x48xf32> to vector<8x16xf32>
    %407 = arith.addf %405, %406 : vector<8x16xf32>
    %408 = arith.negf %407 : vector<8x16xf32>
    %409 = math.exp %408 : vector<8x16xf32>
    %cst_57 = arith.constant 1.000000e+00 : f32
    %410 = vector.broadcast %cst_57 : f32 to vector<8x16xf32>
    %411 = arith.addf %410, %409 : vector<8x16xf32>
    %412 = arith.divf %410, %411 : vector<8x16xf32>
    %413 = vector.extract_strided_slice %388 {offsets = [0, 32], sizes = [8, 16], strides = [1, 1]} : vector<8x48xf32> to vector<8x16xf32>
    %414 = vector.extract_strided_slice %393 {offsets = [0, 32], sizes = [8, 16], strides = [1, 1]} : vector<8x48xf32> to vector<8x16xf32>
    %415 = arith.mulf %404, %414 : vector<8x16xf32>
    %416 = arith.addf %413, %415 : vector<8x16xf32>
    %417 = math.tanh %416 : vector<8x16xf32>
    %418 = arith.subf %354, %417 : vector<8x16xf32>
    %419 = arith.mulf %412, %418 : vector<8x16xf32>
    %420 = arith.addf %417, %419 : vector<8x16xf32>
    %c5_i32_58 = arith.constant 5 : i32
    %421 = vector.broadcast %c5_i32_58 : i32 to vector<8x1xi32>
    %422 = arith.cmpi sgt, %10, %421 : vector<8x1xi32>
    %423 = arith.extui %422 : vector<8x1xi1> to vector<8x1xi32>
    %424 = arith.sitofp %423 : vector<8x1xi32> to vector<8x1xf32>
    %425 = arith.subf %420, %354 : vector<8x16xf32>
    %426 = vector.broadcast %424 : vector<8x1xf32> to vector<8x16xf32>
    %427 = arith.mulf %426, %425 : vector<8x16xf32>
    %428 = arith.addf %354, %427 : vector<8x16xf32>
    %429 = vector.extract_strided_slice %390 {offsets = [0, 0], sizes = [8, 16], strides = [1, 1]} : vector<8x48xf32> to vector<8x16xf32>
    %430 = vector.extract_strided_slice %396 {offsets = [0, 0], sizes = [8, 16], strides = [1, 1]} : vector<8x48xf32> to vector<8x16xf32>
    %431 = arith.addf %429, %430 : vector<8x16xf32>
    %432 = arith.negf %431 : vector<8x16xf32>
    %433 = math.exp %432 : vector<8x16xf32>
    %cst_59 = arith.constant 1.000000e+00 : f32
    %434 = vector.broadcast %cst_59 : f32 to vector<8x16xf32>
    %435 = arith.addf %434, %433 : vector<8x16xf32>
    %436 = arith.divf %434, %435 : vector<8x16xf32>
    %437 = vector.extract_strided_slice %390 {offsets = [0, 16], sizes = [8, 16], strides = [1, 1]} : vector<8x48xf32> to vector<8x16xf32>
    %438 = vector.extract_strided_slice %396 {offsets = [0, 16], sizes = [8, 16], strides = [1, 1]} : vector<8x48xf32> to vector<8x16xf32>
    %439 = arith.addf %437, %438 : vector<8x16xf32>
    %440 = arith.negf %439 : vector<8x16xf32>
    %441 = math.exp %440 : vector<8x16xf32>
    %cst_60 = arith.constant 1.000000e+00 : f32
    %442 = vector.broadcast %cst_60 : f32 to vector<8x16xf32>
    %443 = arith.addf %442, %441 : vector<8x16xf32>
    %444 = arith.divf %442, %443 : vector<8x16xf32>
    %445 = vector.extract_strided_slice %390 {offsets = [0, 32], sizes = [8, 16], strides = [1, 1]} : vector<8x48xf32> to vector<8x16xf32>
    %446 = vector.extract_strided_slice %396 {offsets = [0, 32], sizes = [8, 16], strides = [1, 1]} : vector<8x48xf32> to vector<8x16xf32>
    %447 = arith.mulf %436, %446 : vector<8x16xf32>
    %448 = arith.addf %445, %447 : vector<8x16xf32>
    %449 = math.tanh %448 : vector<8x16xf32>
    %450 = arith.subf %386, %449 : vector<8x16xf32>
    %451 = arith.mulf %444, %450 : vector<8x16xf32>
    %452 = arith.addf %449, %451 : vector<8x16xf32>
    %c0_i32_61 = arith.constant 0 : i32
    %453 = vector.broadcast %c0_i32_61 : i32 to vector<8x1xi32>
    %454 = arith.cmpi sgt, %10, %453 : vector<8x1xi32>
    %455 = arith.extui %454 : vector<8x1xi1> to vector<8x1xi32>
    %456 = arith.sitofp %455 : vector<8x1xi32> to vector<8x1xf32>
    %457 = arith.subf %452, %386 : vector<8x16xf32>
    %458 = vector.broadcast %456 : vector<8x1xf32> to vector<8x16xf32>
    %459 = arith.mulf %458, %457 : vector<8x16xf32>
    %460 = arith.addf %386, %459 : vector<8x16xf32>
    %c0_62 = arith.constant 0 : index
    %c0_63 = arith.constant 0 : index
    %c0_64 = arith.constant 0 : index
    %461 = vector.load %arg4[%c0_62, %c0_63, %c0_64] : memref<1x8x1xf32, #tpu.memory_space<vmem>>, vector<1x8x1xf32>
    %462 = vector.shape_cast %461 : vector<1x8x1xf32> to vector<8x1xf32>
    %cst_65 = arith.constant 0.000000e+00 : f32
    %463 = vector.broadcast %cst_65 : f32 to vector<8x96xf32>
    %464 = tpu.concatenate %428, %460, %463 in 1 : vector<8x16xf32>, vector<8x16xf32>, vector<8x96xf32> -> vector<8x128xf32>
    %465 = vector.broadcast %462 : vector<8x1xf32> to vector<8x128xf32>
    %466 = arith.mulf %464, %465 : vector<8x128xf32>
    %c0_66 = arith.constant 0 : index
    %c0_67 = arith.constant 0 : index
    %c0_68 = arith.constant 0 : index
    %467 = vector.load %arg11[%c0_66, %c0_67, %c0_68] : memref<1x8x128xf32, #tpu.memory_space<vmem>>, vector<1x8x128xf32>
    %468 = vector.shape_cast %467 : vector<1x8x128xf32> to vector<8x128xf32>
    %469 = vector.shape_cast %466 : vector<8x128xf32> to vector<1x8x128xf32>
    tpu.vector_store %arg11[%c0_66, %c0_67, %c0_68], %469 {strides = array<i32>} : memref<1x8x128xf32, #tpu.memory_space<vmem>>, vector<1x8x128xf32>,
    return
  }
  func.func @transform_0(%arg0: i32, %arg1: i32) -> (i32, i32, i32, i32) {
    %c0_i32 = arith.constant 0 : i32
    %c0_i32_0 = arith.constant 0 : i32
    %c0_i32_1 = arith.constant 0 : i32
    return %arg0, %c0_i32, %arg1, %c0_i32_0 : i32, i32, i32, i32
  }
  func.func @transform_1(%arg0: i32, %arg1: i32) -> (i32, i32, i32) {
    %c0_i32 = arith.constant 0 : i32
    %c0_i32_0 = arith.constant 0 : i32
    return %arg0, %arg1, %c0_i32 : i32, i32, i32
  }
  func.func @transform_2(%arg0: i32, %arg1: i32) -> (i32, i32, i32) {
    %c0_i32 = arith.constant 0 : i32
    %c0_i32_0 = arith.constant 0 : i32
    return %arg0, %arg1, %c0_i32 : i32, i32, i32
  }
  func.func @transform_3(%arg0: i32, %arg1: i32) -> (i32, i32) {
    %c0_i32 = arith.constant 0 : i32
    %c0_i32_0 = arith.constant 0 : i32
    %c0_i32_1 = arith.constant 0 : i32
    return %c0_i32, %c0_i32_0 : i32, i32
  }
  func.func @transform_4(%arg0: i32, %arg1: i32) -> (i32, i32) {
    %c0_i32 = arith.constant 0 : i32
    %c0_i32_0 = arith.constant 0 : i32
    %c0_i32_1 = arith.constant 0 : i32
    return %c0_i32, %c0_i32_0 : i32, i32
  }
  func.func @transform_5(%arg0: i32, %arg1: i32) -> (i32, i32) {
    %c0_i32 = arith.constant 0 : i32
    %c0_i32_0 = arith.constant 0 : i32
    %c0_i32_1 = arith.constant 0 : i32
    return %c0_i32, %c0_i32_0 : i32, i32
  }
  func.func @transform_6(%arg0: i32, %arg1: i32) -> (i32, i32) {
    %c0_i32 = arith.constant 0 : i32
    %c0_i32_0 = arith.constant 0 : i32
    %c0_i32_1 = arith.constant 0 : i32
    return %c0_i32, %c0_i32_0 : i32, i32
  }
  func.func @transform_7(%arg0: i32, %arg1: i32) -> (i32, i32) {
    %c0_i32 = arith.constant 0 : i32
    %c0_i32_0 = arith.constant 0 : i32
    %c0_i32_1 = arith.constant 0 : i32
    return %c0_i32, %c0_i32_0 : i32, i32
  }
  func.func @transform_8(%arg0: i32, %arg1: i32) -> (i32, i32) {
    %c0_i32 = arith.constant 0 : i32
    %c0_i32_0 = arith.constant 0 : i32
    %c0_i32_1 = arith.constant 0 : i32
    return %c0_i32, %c0_i32_0 : i32, i32
  }
  func.func @transform_9(%arg0: i32, %arg1: i32) -> (i32, i32, i32) {
    %c0_i32 = arith.constant 0 : i32
    %c0_i32_0 = arith.constant 0 : i32
    return %arg0, %arg1, %c0_i32 : i32, i32, i32
  }
}

</mosaic_0001>

<llo_original>
// kernel: tpu_custom_call.1
$region0: #{tpu_custom_call.1}
  #allocation0 [shape = 'u32[]', space=smem, size = 0x4, offset = 0x4, fixed_abs, tag = 'smem constant byte address 0x4 - core index']
  #allocation1 [shape = 'u32[144,128]{1,0:T(1,128)}', space=vmem, size = 0x12000, scoped, tag = 'internal scratch']
  %s0 = inlined_call_operand.hbm [shape: f32[2,6,8,8], index: 0, kind: input, shape index: {}]
  %s1 = inlined_call_operand.vmem [shape: s32[2,8,1], index: 1, kind: input, shape index: {}]
  %s2 = inlined_call_operand.vmem [shape: f32[2,8,1], index: 2, kind: input, shape index: {}]
  %s3 = inlined_call_operand.vmem [shape: f32[8,96], index: 3, kind: input, shape index: {}]
  %s4 = inlined_call_operand.vmem [shape: f32[1,96], index: 4, kind: input, shape index: {}]
  %s5 = inlined_call_operand.vmem [shape: f32[16,48], index: 5, kind: input, shape index: {}]
  %s6 = inlined_call_operand.vmem [shape: f32[16,48], index: 6, kind: input, shape index: {}]
  %s7 = inlined_call_operand.vmem [shape: f32[1,48], index: 7, kind: input, shape index: {}]
  %s8 = inlined_call_operand.vmem [shape: f32[1,48], index: 8, kind: input, shape index: {}]
  %s9 = inlined_call_operand.hbm [shape: f32[2,8,128], index: 9, kind: output, shape index: {}]
  %s10 = sld [smem:[#allocation0]]
  $region73: #{tpu_custom_call.1} parent=0
    _
  %s12 = ssub.s32 1, %s10
  %s13 = scalar_select 0, %s12, %s10
  $region1: #{tpu_custom_call.1} parent=0
    #allocation2 [shape = 'u8[49152]{0}', space=vmem, size = 0xc000, scoped, tag = 'input window, operand 0']
    #allocation3 [shape = 's32[2]{0}', space=sflag, size = 0x8, scoped, tag = 'scoped memory for tpu_custom_call.1']
    #allocation4 [shape = 's32[2]{0}', space=sflag, size = 0x8, scoped, tag = 'scoped memory for tpu_custom_call.1']
    #allocation5 [shape = 'u8[8192]{0}', space=vmem, size = 0x2000, scoped, tag = 'output window, operand 0']
    %14 = vsyncpa [#allocation3], 0
    %s15 = scalar_lea.sflag [#allocation3], 1
    %16 = vsyncpa %s15, 0
    %17 = vsyncpa [#allocation4], 0
    %s18 = scalar_lea.sflag [#allocation4], 1
    %19 = vsyncpa %s18, 0
    loop: start=0, step=1, limit=4
    $region2: #{tpu_custom_call.1} parent=1 // loop_pre_header
      _
    $region3: #{tpu_custom_call.1} parent=1 // loop_header
      %s21 = sphi 0, %s25
      %p22 = scmp.ge.s32.totalorder %s21, 4
      %s28 = sphi 0, %s40
      %s29 = sphi 0, %s36
      %s30 = sphi 0, %s28
      %s31 = sphi 0, %s29
      %s32 = sphi 0, %s30
      %s33 = sphi 0, %s31
      %s45 = sphi 0, %s47
      %s48 = sphi 0, %s45
      %s49 = sphi 0, %s48
      %s65 = sphi 0, %s49
      %s73 = sphi 0, %s75
      %s76 = sphi 0, %s73
      %s77 = sphi 0, %s76
      %s93 = sphi 0, %s77
      %s101 = sphi 0, %s103
      %s104 = sphi 0, %s101
      %s105 = sphi 0, %s104
      %s121 = sphi 0, %s105
      %s125 = sphi 0, %s125
      %s127 = sphi 0, %s125
      %s128 = sphi 0, %s127
      %s142 = sphi 0, %s128
      %s146 = sphi 0, %s146
      %s148 = sphi 0, %s146
      %s149 = sphi 0, %s148
      %s163 = sphi 0, %s149
      %s167 = sphi 0, %s167
      %s169 = sphi 0, %s167
      %s170 = sphi 0, %s169
      %s184 = sphi 0, %s170
      %s188 = sphi 0, %s188
      %s190 = sphi 0, %s188
      %s191 = sphi 0, %s190
      %s205 = sphi 0, %s191
      %s209 = sphi 0, %s209
      %s211 = sphi 0, %s209
      %s212 = sphi 0, %s211
      %s226 = sphi 0, %s212
      %s230 = sphi 0, %s230
      %s232 = sphi 0, %s230
      %s233 = sphi 0, %s232
      %s247 = sphi 0, %s233
      %s255 = sphi 0, %s257
      %s258 = sphi 0, %s255
      %s259 = sphi 0, %s258
      %s275 = sphi 0, %s259
    $region4: #{tpu_custom_call.1} parent=1 // loop_header_branch
      %24 = sbr.rel (%p22) target = $region8
    $region5: #{tpu_custom_call.1} parent=1 // loop_body
      %s26 = ssub.s32 %s21, 1
      %s27 = ssub.s32 %s21, 2
      %s34 = sadd.s32 1, %s29
      %p35 = scmp.ge.s32.totalorder %s34, 1
      %s36 = scalar_select %p35, 0, %s34
      %s37 = sadd.s32 1, %s28
      %s38 = scalar_select %p35, %s37, %s28
      %p39 = scmp.ge.s32.totalorder %s38, 2
      %s40 = scalar_select %p39, 0, %s38
      %s41 = ssub.s32 %s28, %s40
      %s42 = ssub.s32 %s29, %s36
      %s43 = sor.u32 %s41, %s42
      %p44 = scmp.eq.s32.totalorder %s43, 0
      %s46 = sadd.s32 %s45, 1
      %s47 = scalar_select %p44, %s45, %s46
      %p50 = pneg %p44
      %p51 = scmp.eq.s32.totalorder %s21, 1
      %p52 = por %p50, %p51
      %p53 = scmp.ne.s32.totalorder %s45, %s48
      %p54 = scmp.eq.s32.totalorder %s21, 0
      %p55 = por %p53, %p54
      %p56 = scmp.ne.s32.totalorder %s45, %s48
      %p57 = scmp.eq.s32.totalorder %s26, 1
      %p58 = por %p56, %p57
      %p59 = scmp.ne.s32.totalorder %s48, %s49
      %p60 = scmp.eq.s32.totalorder %s26, 0
      %p61 = por %p59, %p60
      %p62 = scmp.ne.s32.totalorder %s48, %s49
      %p63 = scmp.eq.s32.totalorder %s27, 1
      %p64 = por %p62, %p63
      %p66 = scmp.ne.s32.totalorder %s49, %s65
      %p67 = scmp.eq.s32.totalorder %s27, 0
      %p68 = por %p66, %p67
      %s69 = ssub.s32 %s28, %s40
      %s70 = ssub.s32 %s29, %s36
      %s71 = sor.u32 %s69, %s70
      %p72 = scmp.eq.s32.totalorder %s71, 0
      %s74 = sadd.s32 %s73, 1
      %s75 = scalar_select %p72, %s73, %s74
      %p78 = pneg %p72
      %p79 = scmp.eq.s32.totalorder %s21, 1
      %p80 = por %p78, %p79
      %p81 = scmp.ne.s32.totalorder %s73, %s76
      %p82 = scmp.eq.s32.totalorder %s21, 0
      %p83 = por %p81, %p82
      %p84 = scmp.ne.s32.totalorder %s73, %s76
      %p85 = scmp.eq.s32.totalorder %s26, 1
      %p86 = por %p84, %p85
      %p87 = scmp.ne.s32.totalorder %s76, %s77
      %p88 = scmp.eq.s32.totalorder %s26, 0
      %p89 = por %p87, %p88
      %p90 = scmp.ne.s32.totalorder %s76, %s77
      %p91 = scmp.eq.s32.totalorder %s27, 1
      %p92 = por %p90, %p91
      %p94 = scmp.ne.s32.totalorder %s77, %s93
      %p95 = scmp.eq.s32.totalorder %s27, 0
      %p96 = por %p94, %p95
      %s97 = ssub.s32 %s28, %s40
      %s98 = ssub.s32 %s29, %s36
      %s99 = sor.u32 %s97, %s98
      %p100 = scmp.eq.s32.totalorder %s99, 0
      %s102 = sadd.s32 %s101, 1
      %s103 = scalar_select %p100, %s101, %s102
      %p106 = pneg %p100
      %p107 = scmp.eq.s32.totalorder %s21, 1
      %p108 = por %p106, %p107
      %p109 = scmp.ne.s32.totalorder %s101, %s104
      %p110 = scmp.eq.s32.totalorder %s21, 0
      %p111 = por %p109, %p110
      %p112 = scmp.ne.s32.totalorder %s101, %s104
      %p113 = scmp.eq.s32.totalorder %s26, 1
      %p114 = por %p112, %p113
      %p115 = scmp.ne.s32.totalorder %s104, %s105
      %p116 = scmp.eq.s32.totalorder %s26, 0
      %p117 = por %p115, %p116
      %p118 = scmp.ne.s32.totalorder %s104, %s105
      %p119 = scmp.eq.s32.totalorder %s27, 1
      %p120 = por %p118, %p119
      %p122 = scmp.ne.s32.totalorder %s105, %s121
      %p123 = scmp.eq.s32.totalorder %s27, 0
      %p124 = por %p122, %p123
      %s126 = sadd.s32 %s125, 1
      %p129 = scmp.eq.s32.totalorder %s21, 1
      %p130 = scmp.ne.s32.totalorder %s125, %s127
      %p131 = scmp.eq.s32.totalorder %s21, 0
      %p132 = por %p130, %p131
      %p133 = scmp.ne.s32.totalorder %s125, %s127
      %p134 = scmp.eq.s32.totalorder %s26, 1
      %p135 = por %p133, %p134
      %p136 = scmp.ne.s32.totalorder %s127, %s128
      %p137 = scmp.eq.s32.totalorder %s26, 0
      %p138 = por %p136, %p137
      %p139 = scmp.ne.s32.totalorder %s127, %s128
      %p140 = scmp.eq.s32.totalorder %s27, 1
      %p141 = por %p139, %p140
      %p143 = scmp.ne.s32.totalorder %s128, %s142
      %p144 = scmp.eq.s32.totalorder %s27, 0
      %p145 = por %p143, %p144
      %s147 = sadd.s32 %s146, 1
      %p150 = scmp.eq.s32.totalorder %s21, 1
      %p151 = scmp.ne.s32.totalorder %s146, %s148
      %p152 = scmp.eq.s32.totalorder %s21, 0
      %p153 = por %p151, %p152
      %p154 = scmp.ne.s32.totalorder %s146, %s148
      %p155 = scmp.eq.s32.totalorder %s26, 1
      %p156 = por %p154, %p155
      %p157 = scmp.ne.s32.totalorder %s148, %s149
      %p158 = scmp.eq.s32.totalorder %s26, 0
      %p159 = por %p157, %p158
      %p160 = scmp.ne.s32.totalorder %s148, %s149
      %p161 = scmp.eq.s32.totalorder %s27, 1
      %p162 = por %p160, %p161
      %p164 = scmp.ne.s32.totalorder %s149, %s163
      %p165 = scmp.eq.s32.totalorder %s27, 0
      %p166 = por %p164, %p165
      %s168 = sadd.s32 %s167, 1
      %p171 = scmp.eq.s32.totalorder %s21, 1
      %p172 = scmp.ne.s32.totalorder %s167, %s169
      %p173 = scmp.eq.s32.totalorder %s21, 0
      %p174 = por %p172, %p173
      %p175 = scmp.ne.s32.totalorder %s167, %s169
      %p176 = scmp.eq.s32.totalorder %s26, 1
      %p177 = por %p175, %p176
      %p178 = scmp.ne.s32.totalorder %s169, %s170
      %p179 = scmp.eq.s32.totalorder %s26, 0
      %p180 = por %p178, %p179
      %p181 = scmp.ne.s32.totalorder %s169, %s170
      %p182 = scmp.eq.s32.totalorder %s27, 1
      %p183 = por %p181, %p182
      %p185 = scmp.ne.s32.totalorder %s170, %s184
      %p186 = scmp.eq.s32.totalorder %s27, 0
      %p187 = por %p185, %p186
      %s189 = sadd.s32 %s188, 1
      %p192 = scmp.eq.s32.totalorder %s21, 1
      %p193 = scmp.ne.s32.totalorder %s188, %s190
      %p194 = scmp.eq.s32.totalorder %s21, 0
      %p195 = por %p193, %p194
      %p196 = scmp.ne.s32.totalorder %s188, %s190
      %p197 = scmp.eq.s32.totalorder %s26, 1
      %p198 = por %p196, %p197
      %p199 = scmp.ne.s32.totalorder %s190, %s191
      %p200 = scmp.eq.s32.totalorder %s26, 0
      %p201 = por %p199, %p200
      %p202 = scmp.ne.s32.totalorder %s190, %s191
      %p203 = scmp.eq.s32.totalorder %s27, 1
      %p204 = por %p202, %p203
      %p206 = scmp.ne.s32.totalorder %s191, %s205
      %p207 = scmp.eq.s32.totalorder %s27, 0
      %p208 = por %p206, %p207
      %s210 = sadd.s32 %s209, 1
      %p213 = scmp.eq.s32.totalorder %s21, 1
      %p214 = scmp.ne.s32.totalorder %s209, %s211
      %p215 = scmp.eq.s32.totalorder %s21, 0
      %p216 = por %p214, %p215
      %p217 = scmp.ne.s32.totalorder %s209, %s211
      %p218 = scmp.eq.s32.totalorder %s26, 1
      %p219 = por %p217, %p218
      %p220 = scmp.ne.s32.totalorder %s211, %s212
      %p221 = scmp.eq.s32.totalorder %s26, 0
      %p222 = por %p220, %p221
      %p223 = scmp.ne.s32.totalorder %s211, %s212
      %p224 = scmp.eq.s32.totalorder %s27, 1
      %p225 = por %p223, %p224
      %p227 = scmp.ne.s32.totalorder %s212, %s226
      %p228 = scmp.eq.s32.totalorder %s27, 0
      %p229 = por %p227, %p228
      %s231 = sadd.s32 %s230, 1
      %p234 = scmp.eq.s32.totalorder %s21, 1
      %p235 = scmp.ne.s32.totalorder %s230, %s232
      %p236 = scmp.eq.s32.totalorder %s21, 0
      %p237 = por %p235, %p236
      %p238 = scmp.ne.s32.totalorder %s230, %s232
      %p239 = scmp.eq.s32.totalorder %s26, 1
      %p240 = por %p238, %p239
      %p241 = scmp.ne.s32.totalorder %s232, %s233
      %p242 = scmp.eq.s32.totalorder %s26, 0
      %p243 = por %p241, %p242
      %p244 = scmp.ne.s32.totalorder %s232, %s233
      %p245 = scmp.eq.s32.totalorder %s27, 1
      %p246 = por %p244, %p245
      %p248 = scmp.ne.s32.totalorder %s233, %s247
      %p249 = scmp.eq.s32.totalorder %s27, 0
      %p250 = por %p248, %p249
      %s251 = ssub.s32 %s28, %s40
      %s252 = ssub.s32 %s29, %s36
      %s253 = sor.u32 %s251, %s252
      %p254 = scmp.eq.s32.totalorder %s253, 0
      %s256 = sadd.s32 %s255, 1
      %s257 = scalar_select %p254, %s255, %s256
      %p260 = pneg %p254
      %p261 = scmp.eq.s32.totalorder %s21, 1
      %p262 = por %p260, %p261
      %p263 = scmp.ne.s32.totalorder %s255, %s258
      %p264 = scmp.eq.s32.totalorder %s21, 0
      %p265 = por %p263, %p264
      %p266 = scmp.ne.s32.totalorder %s255, %s258
      %p267 = scmp.eq.s32.totalorder %s26, 1
      %p268 = por %p266, %p267
      %p269 = scmp.ne.s32.totalorder %s258, %s259
      %p270 = scmp.eq.s32.totalorder %s26, 0
      %p271 = por %p269, %p270
      %p272 = scmp.ne.s32.totalorder %s258, %s259
      %p273 = scmp.eq.s32.totalorder %s27, 1
      %p274 = por %p272, %p273
      %p276 = scmp.ne.s32.totalorder %s259, %s275
      %p277 = scmp.eq.s32.totalorder %s27, 0
      %p278 = por %p276, %p277
      %p279 = scmp.le.s32.totalorder 1, %s21
      %p280 = scmp.lt.s32.totalorder %s21, 3
      %p281 = pnand %p279, %p280
      %p282 = pneg %p281
      // Predicated region
      $region9: #{tpu_custom_call.1} parent=5 // pred_check
        _
      $region10: #{tpu_custom_call.1} parent=5 // pred_check_branch
        %284 = sbr.rel (%p281) target = $region12
      $region11: #{tpu_custom_call.1} parent=5 // pred_region
        %s285 = ssub.s32 %s21, 1
        // Predicated region
        $region13: #{tpu_custom_call.1} parent=11 // pred_check
          %p286 = pneg %p138
        $region14: #{tpu_custom_call.1} parent=11 // pred_check_branch
          %288 = sbr.rel (%p286) target = $region16
        $region15: #{tpu_custom_call.1} parent=11 // pred_region
          _
        $region16: #{tpu_custom_call.1} parent=11 // pred_fallthru
          _
        // Predicated region
        $region17: #{tpu_custom_call.1} parent=11 // pred_check
          %p289 = pneg %p159
        $region18: #{tpu_custom_call.1} parent=11 // pred_check_branch
          %291 = sbr.rel (%p289) target = $region20
        $region19: #{tpu_custom_call.1} parent=11 // pred_region
          _
        $region20: #{tpu_custom_call.1} parent=11 // pred_fallthru
          _
        // Predicated region
        $region21: #{tpu_custom_call.1} parent=11 // pred_check
          %p292 = pneg %p180
        $region22: #{tpu_custom_call.1} parent=11 // pred_check_branch
          %294 = sbr.rel (%p292) target = $region24
        $region23: #{tpu_custom_call.1} parent=11 // pred_region
          _
        $region24: #{tpu_custom_call.1} parent=11 // pred_fallthru
          _
        // Predicated region
        $region25: #{tpu_custom_call.1} parent=11 // pred_check
          %p295 = pneg %p201
        $region26: #{tpu_custom_call.1} parent=11 // pred_check_branch
          %297 = sbr.rel (%p295) target = $region28
        $region27: #{tpu_custom_call.1} parent=11 // pred_region
          _
        $region28: #{tpu_custom_call.1} parent=11 // pred_fallthru
          _
        // Predicated region
        $region29: #{tpu_custom_call.1} parent=11 // pred_check
          %p298 = pneg %p222
        $region30: #{tpu_custom_call.1} parent=11 // pred_check_branch
          %300 = sbr.rel (%p298) target = $region32
        $region31: #{tpu_custom_call.1} parent=11 // pred_region
          _
        $region32: #{tpu_custom_call.1} parent=11 // pred_fallthru
          _
        // Predicated region
        $region33: #{tpu_custom_call.1} parent=11 // pred_check
          %p301 = pneg %p243
        $region34: #{tpu_custom_call.1} parent=11 // pred_check_branch
          %303 = sbr.rel (%p301) target = $region36
        $region35: #{tpu_custom_call.1} parent=11 // pred_region
          _
        $region36: #{tpu_custom_call.1} parent=11 // pred_fallthru
          _
      $region12: #{tpu_custom_call.1} parent=5 // pred_fallthru
        _
      %p304 = scmp.lt.s32.totalorder %s21, 2
      // Predicated region
      $region37: #{tpu_custom_call.1} parent=5 // pred_check
        %p305 = pneg %p304
      $region38: #{tpu_custom_call.1} parent=5 // pred_check_branch
        %307 = sbr.rel (%p305) target = $region40
      $region39: #{tpu_custom_call.1} parent=5 // pred_region
        // Predicated region
        $region41: #{tpu_custom_call.1} parent=39 // pred_check
          %p308 = pneg %p55
        $region42: #{tpu_custom_call.1} parent=39 // pred_check_branch
          %310 = sbr.rel (%p308) target = $region44
        $region43: #{tpu_custom_call.1} parent=39 // pred_region
          %s311 = sand.u32 %s45, 1
          %s312 = scalar_lea.sflag [#allocation3], %s311
          %s313 = sand.u32 %s45, 1
          %s314 = smul.addr %s313, 48
          %s315 = scalar_lea.vmem [#allocation2], %s314
          %s317 = ssub.s32 768, 768
          %318 = vsyncadd %s312, %s317
          %s319 = smul.addr %s28, 6
          %s320 = sadd.s32 %s29, %s319
          %s321 = smul.addr %s320, 128
          %s322 = scalar_lea.hbm %s0, %s321
          %s323 = sshll.u32 %s315, 4
          %s324 = int_to_ptr.vmem [resolvable:$true] %s323
          %329 = dma.hbm_to_vmem [thread:$0]  %s322, 768, %s324, %s312, 128, 128, 8
        $region44: #{tpu_custom_call.1} parent=39 // pred_fallthru
          _
        // Predicated region
        $region45: #{tpu_custom_call.1} parent=39 // pred_check
          %p330 = pneg %p83
        $region46: #{tpu_custom_call.1} parent=39 // pred_check_branch
          %332 = sbr.rel (%p330) target = $region48
        $region47: #{tpu_custom_call.1} parent=39 // pred_region
          %p333 = scmp.lt.s32.totalorder %s28, 1
          %s334 = scalar_select %p333, %s28, 1
          %p335 = scmp.lt.s32.totalorder %s29, 0
          %s336 = scalar_select %p335, %s29, 0
          %s337 = sadd.s32 %s336, %s334
          %s338 = smul.addr %s337, 8
          %s339 = scalar_lea.vmem %s1, %s338
        $region48: #{tpu_custom_call.1} parent=39 // pred_fallthru
          _
        // Predicated region
        $region49: #{tpu_custom_call.1} parent=39 // pred_check
          %p340 = pneg %p111
        $region50: #{tpu_custom_call.1} parent=39 // pred_check_branch
          %342 = sbr.rel (%p340) target = $region52
        $region51: #{tpu_custom_call.1} parent=39 // pred_region
          %p343 = scmp.lt.s32.totalorder %s28, 1
          %s344 = scalar_select %p343, %s28, 1
          %p345 = scmp.lt.s32.totalorder %s29, 0
          %s346 = scalar_select %p345, %s29, 0
          %s347 = sadd.s32 %s346, %s344
          %s348 = smul.addr %s347, 8
          %s349 = scalar_lea.vmem %s2, %s348
        $region52: #{tpu_custom_call.1} parent=39 // pred_fallthru
          _
      $region40: #{tpu_custom_call.1} parent=5 // pred_fallthru
        _
      %p350 = scmp.le.s32.totalorder 1, %s21
      %p351 = scmp.lt.s32.totalorder %s21, 3
      %p352 = pnand %p350, %p351
      %p353 = pneg %p352
      // Predicated region
      $region53: #{tpu_custom_call.1} parent=5 // pred_check
        _
      $region54: #{tpu_custom_call.1} parent=5 // pred_check_branch
        %355 = sbr.rel (%p352) target = $region56
      $region55: #{tpu_custom_call.1} parent=5 // pred_region
        %s356 = ssub.s32 %s21, 1
        %s357 = sand.u32 %s48, 1
        %s358 = scalar_lea.sflag [#allocation3], %s357
        %s359 = sand.u32 %s48, 1
        %s360 = smul.addr %s359, 48
        %s361 = scalar_lea.vmem [#allocation2], %s360
        // Predicated region
        $region57: #{tpu_custom_call.1} parent=55 // pred_check
          %p362 = pneg %p61
        $region58: #{tpu_custom_call.1} parent=55 // pred_check_branch
          %364 = sbr.rel (%p362) target = $region60
        $region59: #{tpu_custom_call.1} parent=55 // pred_region
          %365 = dma.done %s358, 768
        $region60: #{tpu_custom_call.1} parent=55 // pred_fallthru
          _
        %s366 = sand.u32 %s48, 1
        %s367 = scalar_lea.sflag [#allocation3], %s366
        %s368 = sand.u32 %s48, 1
        %s369 = smul.addr %s368, 48
        %s370 = scalar_lea.vmem [#allocation2], %s369
        %p371 = pneg %p61
        %p372 = pneg %p58
        %p373 = scmp.lt.s32.totalorder %s30, 1
        %s374 = scalar_select %p373, %s30, 1
        %p375 = scmp.lt.s32.totalorder %s31, 0
        %s376 = scalar_select %p375, %s31, 0
        %s377 = sadd.s32 %s376, %s374
        %s378 = smul.addr %s377, 8
        %s379 = scalar_lea.vmem %s1, %s378
        %p380 = pneg %p89
        %p381 = pneg %p86
        %p382 = scmp.lt.s32.totalorder %s30, 1
        %s383 = scalar_select %p382, %s30, 1
        %p384 = scmp.lt.s32.totalorder %s31, 0
        %s385 = scalar_select %p384, %s31, 0
        %s386 = sadd.s32 %s385, %s383
        %s387 = smul.addr %s386, 8
        %s388 = scalar_lea.vmem %s2, %s387
        %p389 = pneg %p117
        %p390 = pneg %p114
        %p391 = pneg %p138
        %p392 = pneg %p135
        %p393 = pneg %p159
        %p394 = pneg %p156
        %p395 = pneg %p180
        %p396 = pneg %p177
        %p397 = pneg %p201
        %p398 = pneg %p198
        %p399 = pneg %p222
        %p400 = pneg %p219
        %p401 = pneg %p243
        %p402 = pneg %p240
        %p403 = pneg %p271
        %p404 = pneg %p268
        %s405 = sand.u32 %s258, 1
        %s406 = scalar_lea.sflag [#allocation4], %s405
        %s407 = sand.u32 %s258, 1
        %s408 = smul.addr %s407, 8
        %s409 = scalar_lea.vmem [#allocation5], %s408
        %p410 = scmp.lt.s32.totalorder %s30, 1
        %s411 = scalar_select %p410, %s30, 1
        %p412 = scmp.lt.s32.totalorder %s31, 0
        %s413 = scalar_select %p412, %s31, 0
        %s414 = sadd.s32 %s413, %s411
        %s415 = smul.addr %s414, 8
        %s416 = scalar_lea.vmem %s1, %s415
        %p417 = scmp.lt.s32.totalorder %s30, 1
        %s418 = scalar_select %p417, %s30, 1
        %p419 = scmp.lt.s32.totalorder %s31, 0
        %s420 = scalar_select %p419, %s31, 0
        %s421 = sadd.s32 %s420, %s418
        %s422 = smul.addr %s421, 8
        %s423 = scalar_lea.vmem %s2, %s422
        %v424 = vld [vmem:[%s361] sm:$0xff]
        %v425 = vld [vmem:[%s361 + $0x8] sm:$0xff]
        %v426 = vld [vmem:[%s361 + $0x10] sm:$0xff]
        %v427 = vld [vmem:[%s361 + $0x18] sm:$0xff]
        %v428 = vld [vmem:[%s361 + $0x20] sm:$0xff]
        %v429 = vld [vmem:[%s361 + $0x28] sm:$0xff]
        %v430 = vld [vmem:[%s3] sm:$0xff]
        %v431 = vld [vmem:[%s4] sm:$0x1]
        %v433 = vlaneseq
        %v434 = vshrl.u32 %v433, 7
        %v435 = vsub.s32 0, %v434
        %v436 = vrot.slane %v431, %v435
        %vm438 = vcmask 64512
        %v440 = vsel %vm438, %v424, 0
        %v443 = vsel %vm438, %v425, 0
        %v446 = vsel %vm438, %v426, 0
        %v449 = vsel %vm438, %v427, 0
        %v452 = vsel %vm438, %v428, 0
        %v455 = vsel %vm438, %v429, 0
        %457 = vmatprep.subr.mxu0 0.0
        %458 = vmatpush1.msra.mxu0 %v430
        %459 = vmatprep.subr.mxu0 0.0
        %460 = vmatpush1.msra.mxu0 0.0
        %461 = vmatprep.subr.mxu0 0.0
        %462 = vmatpush1.msra.mxu0 0.0
        %463 = vmatprep.subr.mxu0 0.0
        %464 = vmatpush1.msra.mxu0 0.0
        %465 = vmatprep.subr.mxu0 0.0
        %466 = vmatpush1.msra.mxu0 0.0
        %467 = vmatprep.subr.mxu0 0.0
        %468 = vmatpush1.msra.mxu0 0.0
        %469 = vmatprep.subr.mxu0 0.0
        %470 = vmatpush1.msra.mxu0 0.0
        %471 = vmatprep.subr.mxu0 0.0
        %472 = vmatpush1.msra.mxu0 0.0
        %473 = vmatprep.subr.mxu0 0.0
        %474 = vmatpush1.msra.mxu0 0.0
        %475 = vmatprep.subr.mxu0 0.0
        %476 = vmatpush1.msra.mxu0 0.0
        %477 = vmatprep.subr.mxu0 0.0
        %478 = vmatpush1.msra.mxu0 0.0
        %479 = vmatprep.subr.mxu0 0.0
        %480 = vmatpush1.msra.mxu0 0.0
        %481 = vmatprep.subr.mxu0 0.0
        %482 = vmatpush1.msra.mxu0 0.0
        %483 = vmatprep.subr.mxu0 0.0
        %484 = vmatpush1.msra.mxu0 0.0
        %485 = vmatprep.subr.mxu0 0.0
        %486 = vmatpush1.msra.mxu0 0.0
        %487 = vmatprep.subr.mxu0 0.0
        %488 = vmatpush1.msra.mxu0 0.0
        %489 = vmatprep.subr.mxu0 0.0
        %490 = vmatpush1.msra.mxu0 0.0
        %491 = vmatprep.subr.mxu0 0.0
        %492 = vmatpush1.msra.mxu0 0.0
        %493 = vmatprep.subr.mxu0 0.0
        %494 = vmatpush1.msra.mxu0 0.0
        %495 = vmatprep.subr.mxu0 0.0
        %496 = vmatpush1.msra.mxu0 0.0
        %497 = vmatprep.subr.mxu0 0.0
        %498 = vmatpush1.msra.mxu0 0.0
        %499 = vmatprep.subr.mxu0 0.0
        %500 = vmatpush1.msra.mxu0 0.0
        %501 = vmatprep.subr.mxu0 0.0
        %502 = vmatpush1.msra.mxu0 0.0
        %503 = vmatprep.subr.mxu0 0.0
        %504 = vmatpush1.msra.mxu0 0.0
        %505 = vmatprep.subr.mxu0 0.0
        %506 = vmatpush1.msra.mxu0 0.0
        %507 = vmatprep.subr.mxu0 0.0
        %508 = vmatpush1.msra.mxu0 0.0
        %509 = vmatprep.subr.mxu0 0.0
        %510 = vmatpush1.msra.mxu0 0.0
        %511 = vmatprep.subr.mxu0 0.0
        %512 = vmatpush1.msra.mxu0 0.0
        %513 = vmatprep.subr.mxu0 0.0
        %514 = vmatpush1.msra.mxu0 0.0
        %515 = vmatprep.subr.mxu0 0.0
        %516 = vmatpush1.msra.mxu0 0.0
        %517 = vmatprep.subr.mxu0 0.0
        %518 = vmatpush1.msra.mxu0 0.0
        %519 = vmatprep.subr.mxu0 0.0
        %520 = vmatpush1.msra.mxu0 0.0
        %521 = vmatprep.mubr.f32.mxu0 0.0
        %522 = vmatmul.mubr.f32.gmra.mrb[0].mxu0 %v440
        %v523 = vpop.f32.mrb[0].mxu0
        %v524 = vadd.f32 %v436, %v523
        %v525 = vpop.f32.mrb[0].mxu0
        %526 = vmatprep.mubr.f32.mxu0 0.0
        %527 = vmatmul.mubr.f32.gmra.mrb[0].mxu0 %v443
        %v528 = vpop.f32.mrb[0].mxu0
        %v529 = vadd.f32 %v436, %v528
        %v530 = vpop.f32.mrb[0].mxu0
        %531 = vmatprep.mubr.f32.mxu0 0.0
        %532 = vmatmul.mubr.f32.gmra.mrb[0].mxu0 %v446
        %v533 = vpop.f32.mrb[0].mxu0
        %v534 = vadd.f32 %v436, %v533
        %v535 = vpop.f32.mrb[0].mxu0
        %536 = vmatprep.mubr.f32.mxu0 0.0
        %537 = vmatmul.mubr.f32.gmra.mrb[0].mxu0 %v449
        %v538 = vpop.f32.mrb[0].mxu0
        %v539 = vadd.f32 %v436, %v538
        %v540 = vpop.f32.mrb[0].mxu0
        %541 = vmatprep.mubr.f32.mxu0 0.0
        %542 = vmatmul.mubr.f32.gmra.mrb[0].mxu0 %v452
        %v543 = vpop.f32.mrb[0].mxu0
        %v544 = vadd.f32 %v436, %v543
        %v545 = vpop.f32.mrb[0].mxu0
        %546 = vmatprep.mubr.f32.mxu0 0.0
        %547 = vmatmul.mubr.f32.gmra.mrb[0].mxu0 %v455
        %v548 = vpop.f32.mrb[0].mxu0
        %v549 = vadd.f32 %v436, %v548
        %v550 = vpop.f32.mrb[0].mxu0
        %551 = vdwg.mxu0
        %v552 = vld [vmem:[%s416] sm:$0xff]
        %v553 = vld [vmem:[%s5] sm:$0xff]
        %v554 = vld [vmem:[%s5 + $0x8] sm:$0xff]
        %v555 = vld [vmem:[%s6] sm:$0xff]
        %v556 = vld [vmem:[%s6 + $0x8] sm:$0xff]
        %v557 = vld [vmem:[%s7] sm:$0x1]
        %v558 = vld [vmem:[%s8] sm:$0x1]
        %v560 = vlaneseq
        %v561 = vshrl.u32 %v560, 7
        %v562 = vsub.s32 0, %v561
        %v563 = vrot.slane %v557, %v562
        %vm565 = vcmask 130048
        %v567 = vsel %vm565, 0.0, 0
        %569 = vmatprep.subr.mxu0 0.0
        %570 = vmatpush1.msra.mxu0 %v553
        %571 = vmatprep.subr.mxu0 0.0
        %572 = vmatpush1.msra.mxu0 %v554
        %573 = vmatprep.subr.mxu0 0.0
        %574 = vmatpush1.msra.mxu0 0.0
        %575 = vmatprep.subr.mxu0 0.0
        %576 = vmatpush1.msra.mxu0 0.0
        %577 = vmatprep.subr.mxu0 0.0
        %578 = vmatpush1.msra.mxu0 0.0
        %579 = vmatprep.subr.mxu0 0.0
        %580 = vmatpush1.msra.mxu0 0.0
        %581 = vmatprep.subr.mxu0 0.0
        %582 = vmatpush1.msra.mxu0 0.0
        %583 = vmatprep.subr.mxu0 0.0
        %584 = vmatpush1.msra.mxu0 0.0
        %585 = vmatprep.subr.mxu0 0.0
        %586 = vmatpush1.msra.mxu0 0.0
        %587 = vmatprep.subr.mxu0 0.0
        %588 = vmatpush1.msra.mxu0 0.0
        %589 = vmatprep.subr.mxu0 0.0
        %590 = vmatpush1.msra.mxu0 0.0
        %591 = vmatprep.subr.mxu0 0.0
        %592 = vmatpush1.msra.mxu0 0.0
        %593 = vmatprep.subr.mxu0 0.0
        %594 = vmatpush1.msra.mxu0 0.0
        %595 = vmatprep.subr.mxu0 0.0
        %596 = vmatpush1.msra.mxu0 0.0
        %597 = vmatprep.subr.mxu0 0.0
        %598 = vmatpush1.msra.mxu0 0.0
        %599 = vmatprep.subr.mxu0 0.0
        %600 = vmatpush1.msra.mxu0 0.0
        %601 = vmatprep.subr.mxu0 0.0
        %602 = vmatpush1.msra.mxu0 0.0
        %603 = vmatprep.subr.mxu0 0.0
        %604 = vmatpush1.msra.mxu0 0.0
        %605 = vmatprep.subr.mxu0 0.0
        %606 = vmatpush1.msra.mxu0 0.0
        %607 = vmatprep.subr.mxu0 0.0
        %608 = vmatpush1.msra.mxu0 0.0
        %609 = vmatprep.subr.mxu0 0.0
        %610 = vmatpush1.msra.mxu0 0.0
        %611 = vmatprep.subr.mxu0 0.0
        %612 = vmatpush1.msra.mxu0 0.0
        %613 = vmatprep.subr.mxu0 0.0
        %614 = vmatpush1.msra.mxu0 0.0
        %615 = vmatprep.subr.mxu0 0.0
        %616 = vmatpush1.msra.mxu0 0.0
        %617 = vmatprep.subr.mxu0 0.0
        %618 = vmatpush1.msra.mxu0 0.0
        %619 = vmatprep.subr.mxu0 0.0
        %620 = vmatpush1.msra.mxu0 0.0
        %621 = vmatprep.subr.mxu0 0.0
        %622 = vmatpush1.msra.mxu0 0.0
        %623 = vmatprep.subr.mxu0 0.0
        %624 = vmatpush1.msra.mxu0 0.0
        %625 = vmatprep.subr.mxu0 0.0
        %626 = vmatpush1.msra.mxu0 0.0
        %627 = vmatprep.subr.mxu0 0.0
        %628 = vmatpush1.msra.mxu0 0.0
        %629 = vmatprep.subr.mxu0 0.0
        %630 = vmatpush1.msra.mxu0 0.0
        %631 = vmatprep.subr.mxu0 0.0
        %632 = vmatpush1.msra.mxu0 0.0
        %633 = vmatprep.mubr.f32.mxu0 0.0
        %634 = vmatmul.mubr.f32.gmra.mrb[0].mxu0 %v567
        %v635 = vpop.f32.mrb[0].mxu0
        %v636 = vadd.f32 %v563, %v635
        %v637 = vpop.f32.mrb[0].mxu0
        %638 = vdwg.mxu0
        %v640 = vlaneseq
        %v641 = vshrl.u32 %v640, 7
        %v642 = vsub.s32 0, %v641
        %v643 = vrot.slane %v558, %v642
        %645 = vmatprep.subr.mxu0 0.0
        %646 = vmatpush1.msra.mxu0 %v555
        %647 = vmatprep.subr.mxu0 0.0
        %648 = vmatpush1.msra.mxu0 %v556
        %649 = vmatprep.subr.mxu0 0.0
        %650 = vmatpush1.msra.mxu0 0.0
        %651 = vmatprep.subr.mxu0 0.0
        %652 = vmatpush1.msra.mxu0 0.0
        %653 = vmatprep.subr.mxu0 0.0
        %654 = vmatpush1.msra.mxu0 0.0
        %655 = vmatprep.subr.mxu0 0.0
        %656 = vmatpush1.msra.mxu0 0.0
        %657 = vmatprep.subr.mxu0 0.0
        %658 = vmatpush1.msra.mxu0 0.0
        %659 = vmatprep.subr.mxu0 0.0
        %660 = vmatpush1.msra.mxu0 0.0
        %661 = vmatprep.subr.mxu0 0.0
        %662 = vmatpush1.msra.mxu0 0.0
        %663 = vmatprep.subr.mxu0 0.0
        %664 = vmatpush1.msra.mxu0 0.0
        %665 = vmatprep.subr.mxu0 0.0
        %666 = vmatpush1.msra.mxu0 0.0
        %667 = vmatprep.subr.mxu0 0.0
        %668 = vmatpush1.msra.mxu0 0.0
        %669 = vmatprep.subr.mxu0 0.0
        %670 = vmatpush1.msra.mxu0 0.0
        %671 = vmatprep.subr.mxu0 0.0
        %672 = vmatpush1.msra.mxu0 0.0
        %673 = vmatprep.subr.mxu0 0.0
        %674 = vmatpush1.msra.mxu0 0.0
        %675 = vmatprep.subr.mxu0 0.0
        %676 = vmatpush1.msra.mxu0 0.0
        %677 = vmatprep.subr.mxu0 0.0
        %678 = vmatpush1.msra.mxu0 0.0
        %679 = vmatprep.subr.mxu0 0.0
        %680 = vmatpush1.msra.mxu0 0.0
        %681 = vmatprep.subr.mxu0 0.0
        %682 = vmatpush1.msra.mxu0 0.0
        %683 = vmatprep.subr.mxu0 0.0
        %684 = vmatpush1.msra.mxu0 0.0
        %685 = vmatprep.subr.mxu0 0.0
        %686 = vmatpush1.msra.mxu0 0.0
        %687 = vmatprep.subr.mxu0 0.0
        %688 = vmatpush1.msra.mxu0 0.0
        %689 = vmatprep.subr.mxu0 0.0
        %690 = vmatpush1.msra.mxu0 0.0
        %691 = vmatprep.subr.mxu0 0.0
        %692 = vmatpush1.msra.mxu0 0.0
        %693 = vmatprep.subr.mxu0 0.0
        %694 = vmatpush1.msra.mxu0 0.0
        %695 = vmatprep.subr.mxu0 0.0
        %696 = vmatpush1.msra.mxu0 0.0
        %697 = vmatprep.subr.mxu0 0.0
        %698 = vmatpush1.msra.mxu0 0.0
        %699 = vmatprep.subr.mxu0 0.0
        %700 = vmatpush1.msra.mxu0 0.0
        %701 = vmatprep.subr.mxu0 0.0
        %702 = vmatpush1.msra.mxu0 0.0
        %703 = vmatprep.subr.mxu0 0.0
        %704 = vmatpush1.msra.mxu0 0.0
        %705 = vmatprep.subr.mxu0 0.0
        %706 = vmatpush1.msra.mxu0 0.0
        %707 = vmatprep.subr.mxu0 0.0
        %708 = vmatpush1.msra.mxu0 0.0
        %709 = vmatprep.mubr.f32.mxu0 0.0
        %710 = vmatmul.mubr.f32.gmra.mrb[0].mxu0 %v567
        %v711 = vpop.f32.mrb[0].mxu0
        %v712 = vadd.f32 %v643, %v711
        %v713 = vpop.f32.mrb[0].mxu0
        %714 = vdwg.mxu0
        %v715 = vadd.f32 %v524, %v636
        %v716 = vxor.u32 %v715, 2147483648
        %v717 = vmul.f32 %v716, 1.442695
        %v718 = vpow.pop %v717
        %v719 = vadd.f32 %v718, 1.0
        %v720 = vrcp.pop %v719
        %v721 = vmul.f32 1.0, %v720
        %723 = vrot.lane.b32.xlu0 %v636, 96
        %v724 = vpop.permute.xlu0 %723
        %v726 = vmul.f32 %v721, %v724
        %728 = vrot.lane.b32.xlu0 %v726, 32
        %v729 = vpop.permute.xlu0 %728
        %v731 = vadd.f32 %v524, %v729
        %v732 = vtanh.pop %v731
        %v733 = vsub.f32 0.0, %v732
        %735 = vrot.lane.b32.xlu0 %v733, 112
        %v736 = vpop.permute.xlu0 %735
        %v738 = vmul.f32 %v721, %v736
        %740 = vrot.lane.b32.xlu0 %v738, 16
        %v741 = vpop.permute.xlu0 %740
        %v743 = vadd.f32 %v732, %v741
        %vm744 = vcmp.gt.s32.totalorder %v552, 0
        %v745 = vsel %vm744, 1, 0
        %v746 = vcvt.s32.f32 %v745
        %748 = vset.pattern.permute.xlu0 0
        %749 = vperm.xlu0 %748, %v746
        %v750 = vpop.permute.xlu0 %749
        %v752 = vmul.f32 %v750, %v743
        %v753 = vadd.f32 %v752, 0.0
        %755 = vrot.lane.b32.xlu0 %v712, 48
        %v756 = vpop.permute.xlu0 %755
        %v758 = vadd.f32 %v549, %v756
        %v759 = vxor.u32 %v758, 2147483648
        %v760 = vmul.f32 %v759, 1.442695
        %v761 = vpow.pop %v760
        %v762 = vadd.f32 %v761, 1.0
        %v763 = vrcp.pop %v762
        %v764 = vmul.f32 1.0, %v763
        %765 = vrot.lane.b32.xlu0 %v712, 16
        %v766 = vpop.permute.xlu0 %765
        %v768 = vmul.f32 %v764, %v766
        %770 = vrot.lane.b32.xlu0 %v768, 32
        %v771 = vpop.permute.xlu0 %770
        %v773 = vadd.f32 %v549, %v771
        %v774 = vtanh.pop %v773
        %v775 = vsub.f32 0.0, %v774
        %777 = vrot.lane.b32.xlu0 %v775, 112
        %v778 = vpop.permute.xlu0 %777
        %v780 = vmul.f32 %v764, %v778
        %782 = vrot.lane.b32.xlu0 %v780, 16
        %v783 = vpop.permute.xlu0 %782
        %v785 = vadd.f32 %v774, %v783
        %vm786 = vcmp.gt.s32.totalorder %v552, 5
        %v787 = vsel %vm786, 1, 0
        %v788 = vcvt.s32.f32 %v787
        %790 = vset.pattern.permute.xlu0 0
        %791 = vperm.xlu0 %790, %v788
        %v792 = vpop.permute.xlu0 %791
        %v794 = vmul.f32 %v792, %v785
        %v795 = vadd.f32 %v794, 0.0
        %797 = vrot.lane.b32.xlu0 %v753, 96
        %v798 = vpop.permute.xlu0 %797
        %v799 = vsel %vm565, %v798, 0
        %801 = vmatprep.subr.mxu0 0.0
        %802 = vmatpush1.msra.mxu0 %v553
        %803 = vmatprep.subr.mxu0 0.0
        %804 = vmatpush1.msra.mxu0 %v554
        %805 = vmatprep.subr.mxu0 0.0
        %806 = vmatpush1.msra.mxu0 0.0
        %807 = vmatprep.subr.mxu0 0.0
        %808 = vmatpush1.msra.mxu0 0.0
        %809 = vmatprep.subr.mxu0 0.0
        %810 = vmatpush1.msra.mxu0 0.0
        %811 = vmatprep.subr.mxu0 0.0
        %812 = vmatpush1.msra.mxu0 0.0
        %813 = vmatprep.subr.mxu0 0.0
        %814 = vmatpush1.msra.mxu0 0.0
        %815 = vmatprep.subr.mxu0 0.0
        %816 = vmatpush1.msra.mxu0 0.0
        %817 = vmatprep.subr.mxu0 0.0
        %818 = vmatpush1.msra.mxu0 0.0
        %819 = vmatprep.subr.mxu0 0.0
        %820 = vmatpush1.msra.mxu0 0.0
        %821 = vmatprep.subr.mxu0 0.0
        %822 = vmatpush1.msra.mxu0 0.0
        %823 = vmatprep.subr.mxu0 0.0
        %824 = vmatpush1.msra.mxu0 0.0
        %825 = vmatprep.subr.mxu0 0.0
        %826 = vmatpush1.msra.mxu0 0.0
        %827 = vmatprep.subr.mxu0 0.0
        %828 = vmatpush1.msra.mxu0 0.0
        %829 = vmatprep.subr.mxu0 0.0
        %830 = vmatpush1.msra.mxu0 0.0
        %831 = vmatprep.subr.mxu0 0.0
        %832 = vmatpush1.msra.mxu0 0.0
        %833 = vmatprep.subr.mxu0 0.0
        %834 = vmatpush1.msra.mxu0 0.0
        %835 = vmatprep.subr.mxu0 0.0
        %836 = vmatpush1.msra.mxu0 0.0
        %837 = vmatprep.subr.mxu0 0.0
        %838 = vmatpush1.msra.mxu0 0.0
        %839 = vmatprep.subr.mxu0 0.0
        %840 = vmatpush1.msra.mxu0 0.0
        %841 = vmatprep.subr.mxu0 0.0
        %842 = vmatpush1.msra.mxu0 0.0
        %843 = vmatprep.subr.mxu0 0.0
        %844 = vmatpush1.msra.mxu0 0.0
        %845 = vmatprep.subr.mxu0 0.0
        %846 = vmatpush1.msra.mxu0 0.0
        %847 = vmatprep.subr.mxu0 0.0
        %848 = vmatpush1.msra.mxu0 0.0
        %849 = vmatprep.subr.mxu0 0.0
        %850 = vmatpush1.msra.mxu0 0.0
        %851 = vmatprep.subr.mxu0 0.0
        %852 = vmatpush1.msra.mxu0 0.0
        %853 = vmatprep.subr.mxu0 0.0
        %854 = vmatpush1.msra.mxu0 0.0
        %855 = vmatprep.subr.mxu0 0.0
        %856 = vmatpush1.msra.mxu0 0.0
        %857 = vmatprep.subr.mxu0 0.0
        %858 = vmatpush1.msra.mxu0 0.0
        %859 = vmatprep.subr.mxu0 0.0
        %860 = vmatpush1.msra.mxu0 0.0
        %861 = vmatprep.subr.mxu0 0.0
        %862 = vmatpush1.msra.mxu0 0.0
        %863 = vmatprep.subr.mxu0 0.0
        %864 = vmatpush1.msra.mxu0 0.0
        %865 = vmatprep.mubr.f32.mxu0 0.0
        %866 = vmatmul.mubr.f32.gmra.mrb[0].mxu0 %v799
        %v867 = vpop.f32.mrb[0].mxu0
        %v868 = vadd.f32 %v563, %v867
        %v869 = vpop.f32.mrb[0].mxu0
        %870 = vdwg.mxu0
        %872 = vrot.lane.b32.xlu0 %v795, 48
        %v873 = vpop.permute.xlu0 %872
        %v874 = vsel %vm565, %v873, 0
        %876 = vmatprep.subr.mxu0 0.0
        %877 = vmatpush1.msra.mxu0 %v555
        %878 = vmatprep.subr.mxu0 0.0
        %879 = vmatpush1.msra.mxu0 %v556
        %880 = vmatprep.subr.mxu0 0.0
        %881 = vmatpush1.msra.mxu0 0.0
        %882 = vmatprep.subr.mxu0 0.0
        %883 = vmatpush1.msra.mxu0 0.0
        %884 = vmatprep.subr.mxu0 0.0
        %885 = vmatpush1.msra.mxu0 0.0
        %886 = vmatprep.subr.mxu0 0.0
        %887 = vmatpush1.msra.mxu0 0.0
        %888 = vmatprep.subr.mxu0 0.0
        %889 = vmatpush1.msra.mxu0 0.0
        %890 = vmatprep.subr.mxu0 0.0
        %891 = vmatpush1.msra.mxu0 0.0
        %892 = vmatprep.subr.mxu0 0.0
        %893 = vmatpush1.msra.mxu0 0.0
        %894 = vmatprep.subr.mxu0 0.0
        %895 = vmatpush1.msra.mxu0 0.0
        %896 = vmatprep.subr.mxu0 0.0
        %897 = vmatpush1.msra.mxu0 0.0
        %898 = vmatprep.subr.mxu0 0.0
        %899 = vmatpush1.msra.mxu0 0.0
        %900 = vmatprep.subr.mxu0 0.0
        %901 = vmatpush1.msra.mxu0 0.0
        %902 = vmatprep.subr.mxu0 0.0
        %903 = vmatpush1.msra.mxu0 0.0
        %904 = vmatprep.subr.mxu0 0.0
        %905 = vmatpush1.msra.mxu0 0.0
        %906 = vmatprep.subr.mxu0 0.0
        %907 = vmatpush1.msra.mxu0 0.0
        %908 = vmatprep.subr.mxu0 0.0
        %909 = vmatpush1.msra.mxu0 0.0
        %910 = vmatprep.subr.mxu0 0.0
        %911 = vmatpush1.msra.mxu0 0.0
        %912 = vmatprep.subr.mxu0 0.0
        %913 = vmatpush1.msra.mxu0 0.0
        %914 = vmatprep.subr.mxu0 0.0
        %915 = vmatpush1.msra.mxu0 0.0
        %916 = vmatprep.subr.mxu0 0.0
        %917 = vmatpush1.msra.mxu0 0.0
        %918 = vmatprep.subr.mxu0 0.0
        %919 = vmatpush1.msra.mxu0 0.0
        %920 = vmatprep.subr.mxu0 0.0
        %921 = vmatpush1.msra.mxu0 0.0
        %922 = vmatprep.subr.mxu0 0.0
        %923 = vmatpush1.msra.mxu0 0.0
        %924 = vmatprep.subr.mxu0 0.0
        %925 = vmatpush1.msra.mxu0 0.0
        %926 = vmatprep.subr.mxu0 0.0
        %927 = vmatpush1.msra.mxu0 0.0
        %928 = vmatprep.subr.mxu0 0.0
        %929 = vmatpush1.msra.mxu0 0.0
        %930 = vmatprep.subr.mxu0 0.0
        %931 = vmatpush1.msra.mxu0 0.0
        %932 = vmatprep.subr.mxu0 0.0
        %933 = vmatpush1.msra.mxu0 0.0
        %934 = vmatprep.subr.mxu0 0.0
        %935 = vmatpush1.msra.mxu0 0.0
        %936 = vmatprep.subr.mxu0 0.0
        %937 = vmatpush1.msra.mxu0 0.0
        %938 = vmatprep.subr.mxu0 0.0
        %939 = vmatpush1.msra.mxu0 0.0
        %940 = vmatprep.mubr.f32.mxu0 0.0
        %941 = vmatmul.mubr.f32.gmra.mrb[0].mxu0 %v874
        %v942 = vpop.f32.mrb[0].mxu0
        %v943 = vadd.f32 %v643, %v942
        %v944 = vpop.f32.mrb[0].mxu0
        %945 = vdwg.mxu0
        %v946 = vadd.f32 %v529, %v868
        %v947 = vxor.u32 %v946, 2147483648
        %v948 = vmul.f32 %v947, 1.442695
        %v949 = vpow.pop %v948
        %v950 = vadd.f32 %v949, 1.0
        %v951 = vrcp.pop %v950
        %v952 = vmul.f32 1.0, %v951
        %954 = vrot.lane.b32.xlu0 %v868, 96
        %v955 = vpop.permute.xlu0 %954
        %v957 = vmul.f32 %v952, %v955
        %959 = vrot.lane.b32.xlu0 %v957, 32
        %v960 = vpop.permute.xlu0 %959
        %v962 = vadd.f32 %v529, %v960
        %v963 = vtanh.pop %v962
        %v964 = vsub.f32 %v753, %v963
        %966 = vrot.lane.b32.xlu0 %v964, 112
        %v967 = vpop.permute.xlu0 %966
        %v969 = vmul.f32 %v952, %v967
        %971 = vrot.lane.b32.xlu0 %v969, 16
        %v972 = vpop.permute.xlu0 %971
        %v974 = vadd.f32 %v963, %v972
        %vm975 = vcmp.gt.s32.totalorder %v552, 1
        %v976 = vsel %vm975, 1, 0
        %v977 = vcvt.s32.f32 %v976
        %v978 = vsub.f32 %v974, %v753
        %980 = vset.pattern.permute.xlu0 0
        %981 = vperm.xlu0 %980, %v977
        %v982 = vpop.permute.xlu0 %981
        %v984 = vmul.f32 %v982, %v978
        %v985 = vadd.f32 %v753, %v984
        %987 = vrot.lane.b32.xlu0 %v943, 48
        %v988 = vpop.permute.xlu0 %987
        %v990 = vadd.f32 %v544, %v988
        %v991 = vxor.u32 %v990, 2147483648
        %v992 = vmul.f32 %v991, 1.442695
        %v993 = vpow.pop %v992
        %v994 = vadd.f32 %v993, 1.0
        %v995 = vrcp.pop %v994
        %v996 = vmul.f32 1.0, %v995
        %997 = vrot.lane.b32.xlu0 %v943, 16
        %v998 = vpop.permute.xlu0 %997
        %v1000 = vmul.f32 %v996, %v998
        %1002 = vrot.lane.b32.xlu0 %v1000, 32
        %v1003 = vpop.permute.xlu0 %1002
        %v1005 = vadd.f32 %v544, %v1003
        %v1006 = vtanh.pop %v1005
        %v1007 = vsub.f32 %v795, %v1006
        %1009 = vrot.lane.b32.xlu0 %v1007, 112
        %v1010 = vpop.permute.xlu0 %1009
        %v1012 = vmul.f32 %v996, %v1010
        %1014 = vrot.lane.b32.xlu0 %v1012, 16
        %v1015 = vpop.permute.xlu0 %1014
        %v1017 = vadd.f32 %v1006, %v1015
        %vm1018 = vcmp.gt.s32.totalorder %v552, 4
        %v1019 = vsel %vm1018, 1, 0
        %v1020 = vcvt.s32.f32 %v1019
        %v1021 = vsub.f32 %v1017, %v795
        %1023 = vset.pattern.permute.xlu0 0
        %1024 = vperm.xlu0 %1023, %v1020
        %v1025 = vpop.permute.xlu0 %1024
        %v1027 = vmul.f32 %v1025, %v1021
        %v1028 = vadd.f32 %v795, %v1027
        %1030 = vrot.lane.b32.xlu0 %v985, 96
        %v1031 = vpop.permute.xlu0 %1030
        %v1032 = vsel %vm565, %v1031, 0
        %1034 = vmatprep.subr.mxu0 0.0
        %1035 = vmatpush1.msra.mxu0 %v553
        %1036 = vmatprep.subr.mxu0 0.0
        %1037 = vmatpush1.msra.mxu0 %v554
        %1038 = vmatprep.subr.mxu0 0.0
        %1039 = vmatpush1.msra.mxu0 0.0
        %1040 = vmatprep.subr.mxu0 0.0
        %1041 = vmatpush1.msra.mxu0 0.0
        %1042 = vmatprep.subr.mxu0 0.0
        %1043 = vmatpush1.msra.mxu0 0.0
        %1044 = vmatprep.subr.mxu0 0.0
        %1045 = vmatpush1.msra.mxu0 0.0
        %1046 = vmatprep.subr.mxu0 0.0
        %1047 = vmatpush1.msra.mxu0 0.0
        %1048 = vmatprep.subr.mxu0 0.0
        %1049 = vmatpush1.msra.mxu0 0.0
        %1050 = vmatprep.subr.mxu0 0.0
        %1051 = vmatpush1.msra.mxu0 0.0
        %1052 = vmatprep.subr.mxu0 0.0
        %1053 = vmatpush1.msra.mxu0 0.0
        %1054 = vmatprep.subr.mxu0 0.0
        %1055 = vmatpush1.msra.mxu0 0.0
        %1056 = vmatprep.subr.mxu0 0.0
        %1057 = vmatpush1.msra.mxu0 0.0
        %1058 = vmatprep.subr.mxu0 0.0
        %1059 = vmatpush1.msra.mxu0 0.0
        %1060 = vmatprep.subr.mxu0 0.0
        %1061 = vmatpush1.msra.mxu0 0.0
        %1062 = vmatprep.subr.mxu0 0.0
        %1063 = vmatpush1.msra.mxu0 0.0
        %1064 = vmatprep.subr.mxu0 0.0
        %1065 = vmatpush1.msra.mxu0 0.0
        %1066 = vmatprep.subr.mxu0 0.0
        %1067 = vmatpush1.msra.mxu0 0.0
        %1068 = vmatprep.subr.mxu0 0.0
        %1069 = vmatpush1.msra.mxu0 0.0
        %1070 = vmatprep.subr.mxu0 0.0
        %1071 = vmatpush1.msra.mxu0 0.0
        %1072 = vmatprep.subr.mxu0 0.0
        %1073 = vmatpush1.msra.mxu0 0.0
        %1074 = vmatprep.subr.mxu0 0.0
        %1075 = vmatpush1.msra.mxu0 0.0
        %1076 = vmatprep.subr.mxu0 0.0
        %1077 = vmatpush1.msra.mxu0 0.0
        %1078 = vmatprep.subr.mxu0 0.0
        %1079 = vmatpush1.msra.mxu0 0.0
        %1080 = vmatprep.subr.mxu0 0.0
        %1081 = vmatpush1.msra.mxu0 0.0
        %1082 = vmatprep.subr.mxu0 0.0
        %1083 = vmatpush1.msra.mxu0 0.0
        %1084 = vmatprep.subr.mxu0 0.0
        %1085 = vmatpush1.msra.mxu0 0.0
        %1086 = vmatprep.subr.mxu0 0.0
        %1087 = vmatpush1.msra.mxu0 0.0
        %1088 = vmatprep.subr.mxu0 0.0
        %1089 = vmatpush1.msra.mxu0 0.0
        %1090 = vmatprep.subr.mxu0 0.0
        %1091 = vmatpush1.msra.mxu0 0.0
        %1092 = vmatprep.subr.mxu0 0.0
        %1093 = vmatpush1.msra.mxu0 0.0
        %1094 = vmatprep.subr.mxu0 0.0
        %1095 = vmatpush1.msra.mxu0 0.0
        %1096 = vmatprep.subr.mxu0 0.0
        %1097 = vmatpush1.msra.mxu0 0.0
        %1098 = vmatprep.mubr.f32.mxu0 0.0
        %1099 = vmatmul.mubr.f32.gmra.mrb[0].mxu0 %v1032
        %v1100 = vpop.f32.mrb[0].mxu0
        %v1101 = vadd.f32 %v563, %v1100
        %v1102 = vpop.f32.mrb[0].mxu0
        %1103 = vdwg.mxu0
        %1105 = vrot.lane.b32.xlu0 %v1028, 48
        %v1106 = vpop.permute.xlu0 %1105
        %v1107 = vsel %vm565, %v1106, 0
        %1109 = vmatprep.subr.mxu0 0.0
        %1110 = vmatpush1.msra.mxu0 %v555
        %1111 = vmatprep.subr.mxu0 0.0
        %1112 = vmatpush1.msra.mxu0 %v556
        %1113 = vmatprep.subr.mxu0 0.0
        %1114 = vmatpush1.msra.mxu0 0.0
        %1115 = vmatprep.subr.mxu0 0.0
        %1116 = vmatpush1.msra.mxu0 0.0
        %1117 = vmatprep.subr.mxu0 0.0
        %1118 = vmatpush1.msra.mxu0 0.0
        %1119 = vmatprep.subr.mxu0 0.0
        %1120 = vmatpush1.msra.mxu0 0.0
        %1121 = vmatprep.subr.mxu0 0.0
        %1122 = vmatpush1.msra.mxu0 0.0
        %1123 = vmatprep.subr.mxu0 0.0
        %1124 = vmatpush1.msra.mxu0 0.0
        %1125 = vmatprep.subr.mxu0 0.0
        %1126 = vmatpush1.msra.mxu0 0.0
        %1127 = vmatprep.subr.mxu0 0.0
        %1128 = vmatpush1.msra.mxu0 0.0
        %1129 = vmatprep.subr.mxu0 0.0
        %1130 = vmatpush1.msra.mxu0 0.0
        %1131 = vmatprep.subr.mxu0 0.0
        %1132 = vmatpush1.msra.mxu0 0.0
        %1133 = vmatprep.subr.mxu0 0.0
        %1134 = vmatpush1.msra.mxu0 0.0
        %1135 = vmatprep.subr.mxu0 0.0
        %1136 = vmatpush1.msra.mxu0 0.0
        %1137 = vmatprep.subr.mxu0 0.0
        %1138 = vmatpush1.msra.mxu0 0.0
        %1139 = vmatprep.subr.mxu0 0.0
        %1140 = vmatpush1.msra.mxu0 0.0
        %1141 = vmatprep.subr.mxu0 0.0
        %1142 = vmatpush1.msra.mxu0 0.0
        %1143 = vmatprep.subr.mxu0 0.0
        %1144 = vmatpush1.msra.mxu0 0.0
        %1145 = vmatprep.subr.mxu0 0.0
        %1146 = vmatpush1.msra.mxu0 0.0
        %1147 = vmatprep.subr.mxu0 0.0
        %1148 = vmatpush1.msra.mxu0 0.0
        %1149 = vmatprep.subr.mxu0 0.0
        %1150 = vmatpush1.msra.mxu0 0.0
        %1151 = vmatprep.subr.mxu0 0.0
        %1152 = vmatpush1.msra.mxu0 0.0
        %1153 = vmatprep.subr.mxu0 0.0
        %1154 = vmatpush1.msra.mxu0 0.0
        %1155 = vmatprep.subr.mxu0 0.0
        %1156 = vmatpush1.msra.mxu0 0.0
        %1157 = vmatprep.subr.mxu0 0.0
        %1158 = vmatpush1.msra.mxu0 0.0
        %1159 = vmatprep.subr.mxu0 0.0
        %1160 = vmatpush1.msra.mxu0 0.0
        %1161 = vmatprep.subr.mxu0 0.0
        %1162 = vmatpush1.msra.mxu0 0.0
        %1163 = vmatprep.subr.mxu0 0.0
        %1164 = vmatpush1.msra.mxu0 0.0
        %1165 = vmatprep.subr.mxu0 0.0
        %1166 = vmatpush1.msra.mxu0 0.0
        %1167 = vmatprep.subr.mxu0 0.0
        %1168 = vmatpush1.msra.mxu0 0.0
        %1169 = vmatprep.subr.mxu0 0.0
        %1170 = vmatpush1.msra.mxu0 0.0
        %1171 = vmatprep.subr.mxu0 0.0
        %1172 = vmatpush1.msra.mxu0 0.0
        %1173 = vmatprep.mubr.f32.mxu0 0.0
        %1174 = vmatmul.mubr.f32.gmra.mrb[0].mxu0 %v1107
        %v1175 = vpop.f32.mrb[0].mxu0
        %v1176 = vadd.f32 %v643, %v1175
        %v1177 = vpop.f32.mrb[0].mxu0
        %1178 = vdwg.mxu0
        %v1179 = vadd.f32 %v534, %v1101
        %v1180 = vxor.u32 %v1179, 2147483648
        %v1181 = vmul.f32 %v1180, 1.442695
        %v1182 = vpow.pop %v1181
        %v1183 = vadd.f32 %v1182, 1.0
        %v1184 = vrcp.pop %v1183
        %v1185 = vmul.f32 1.0, %v1184
        %1187 = vrot.lane.b32.xlu0 %v1101, 96
        %v1188 = vpop.permute.xlu0 %1187
        %v1190 = vmul.f32 %v1185, %v1188
        %1192 = vrot.lane.b32.xlu0 %v1190, 32
        %v1193 = vpop.permute.xlu0 %1192
        %v1195 = vadd.f32 %v534, %v1193
        %v1196 = vtanh.pop %v1195
        %v1197 = vsub.f32 %v985, %v1196
        %1199 = vrot.lane.b32.xlu0 %v1197, 112
        %v1200 = vpop.permute.xlu0 %1199
        %v1202 = vmul.f32 %v1185, %v1200
        %1204 = vrot.lane.b32.xlu0 %v1202, 16
        %v1205 = vpop.permute.xlu0 %1204
        %v1207 = vadd.f32 %v1196, %v1205
        %vm1208 = vcmp.gt.s32.totalorder %v552, 2
        %v1209 = vsel %vm1208, 1, 0
        %v1210 = vcvt.s32.f32 %v1209
        %v1211 = vsub.f32 %v1207, %v985
        %1213 = vset.pattern.permute.xlu0 0
        %1214 = vperm.xlu0 %1213, %v1210
        %v1215 = vpop.permute.xlu0 %1214
        %v1217 = vmul.f32 %v1215, %v1211
        %v1218 = vadd.f32 %v985, %v1217
        %1220 = vrot.lane.b32.xlu0 %v1176, 48
        %v1221 = vpop.permute.xlu0 %1220
        %v1223 = vadd.f32 %v539, %v1221
        %v1224 = vxor.u32 %v1223, 2147483648
        %v1225 = vmul.f32 %v1224, 1.442695
        %v1226 = vpow.pop %v1225
        %v1227 = vadd.f32 %v1226, 1.0
        %v1228 = vrcp.pop %v1227
        %v1229 = vmul.f32 1.0, %v1228
        %1230 = vrot.lane.b32.xlu0 %v1176, 16
        %v1231 = vpop.permute.xlu0 %1230
        %v1233 = vmul.f32 %v1229, %v1231
        %1235 = vrot.lane.b32.xlu0 %v1233, 32
        %v1236 = vpop.permute.xlu0 %1235
        %v1238 = vadd.f32 %v539, %v1236
        %v1239 = vtanh.pop %v1238
        %v1240 = vsub.f32 %v1028, %v1239
        %1242 = vrot.lane.b32.xlu0 %v1240, 112
        %v1243 = vpop.permute.xlu0 %1242
        %v1245 = vmul.f32 %v1229, %v1243
        %1247 = vrot.lane.b32.xlu0 %v1245, 16
        %v1248 = vpop.permute.xlu0 %1247
        %v1250 = vadd.f32 %v1239, %v1248
        %vm1251 = vcmp.gt.s32.totalorder %v552, 3
        %v1252 = vsel %vm1251, 1, 0
        %v1253 = vcvt.s32.f32 %v1252
        %v1254 = vsub.f32 %v1250, %v1028
        %1256 = vset.pattern.permute.xlu0 0
        %1257 = vperm.xlu0 %1256, %v1253
        %v1258 = vpop.permute.xlu0 %1257
        %v1260 = vmul.f32 %v1258, %v1254
        %v1261 = vadd.f32 %v1028, %v1260
        %1263 = vrot.lane.b32.xlu0 %v1218, 96
        %v1264 = vpop.permute.xlu0 %1263
        %v1265 = vsel %vm565, %v1264, 0
        %1267 = vmatprep.subr.mxu0 0.0
        %1268 = vmatpush1.msra.mxu0 %v553
        %1269 = vmatprep.subr.mxu0 0.0
        %1270 = vmatpush1.msra.mxu0 %v554
        %1271 = vmatprep.subr.mxu0 0.0
        %1272 = vmatpush1.msra.mxu0 0.0
        %1273 = vmatprep.subr.mxu0 0.0
        %1274 = vmatpush1.msra.mxu0 0.0
        %1275 = vmatprep.subr.mxu0 0.0
        %1276 = vmatpush1.msra.mxu0 0.0
        %1277 = vmatprep.subr.mxu0 0.0
        %1278 = vmatpush1.msra.mxu0 0.0
        %1279 = vmatprep.subr.mxu0 0.0
        %1280 = vmatpush1.msra.mxu0 0.0
        %1281 = vmatprep.subr.mxu0 0.0
        %1282 = vmatpush1.msra.mxu0 0.0
        %1283 = vmatprep.subr.mxu0 0.0
        %1284 = vmatpush1.msra.mxu0 0.0
        %1285 = vmatprep.subr.mxu0 0.0
        %1286 = vmatpush1.msra.mxu0 0.0
        %1287 = vmatprep.subr.mxu0 0.0
        %1288 = vmatpush1.msra.mxu0 0.0
        %1289 = vmatprep.subr.mxu0 0.0
        %1290 = vmatpush1.msra.mxu0 0.0
        %1291 = vmatprep.subr.mxu0 0.0
        %1292 = vmatpush1.msra.mxu0 0.0
        %1293 = vmatprep.subr.mxu0 0.0
        %1294 = vmatpush1.msra.mxu0 0.0
        %1295 = vmatprep.subr.mxu0 0.0
        %1296 = vmatpush1.msra.mxu0 0.0
        %1297 = vmatprep.subr.mxu0 0.0
        %1298 = vmatpush1.msra.mxu0 0.0
        %1299 = vmatprep.subr.mxu0 0.0
        %1300 = vmatpush1.msra.mxu0 0.0
        %1301 = vmatprep.subr.mxu0 0.0
        %1302 = vmatpush1.msra.mxu0 0.0
        %1303 = vmatprep.subr.mxu0 0.0
        %1304 = vmatpush1.msra.mxu0 0.0
        %1305 = vmatprep.subr.mxu0 0.0
        %1306 = vmatpush1.msra.mxu0 0.0
        %1307 = vmatprep.subr.mxu0 0.0
        %1308 = vmatpush1.msra.mxu0 0.0
        %1309 = vmatprep.subr.mxu0 0.0
        %1310 = vmatpush1.msra.mxu0 0.0
        %1311 = vmatprep.subr.mxu0 0.0
        %1312 = vmatpush1.msra.mxu0 0.0
        %1313 = vmatprep.subr.mxu0 0.0
        %1314 = vmatpush1.msra.mxu0 0.0
        %1315 = vmatprep.subr.mxu0 0.0
        %1316 = vmatpush1.msra.mxu0 0.0
        %1317 = vmatprep.subr.mxu0 0.0
        %1318 = vmatpush1.msra.mxu0 0.0
        %1319 = vmatprep.subr.mxu0 0.0
        %1320 = vmatpush1.msra.mxu0 0.0
        %1321 = vmatprep.subr.mxu0 0.0
        %1322 = vmatpush1.msra.mxu0 0.0
        %1323 = vmatprep.subr.mxu0 0.0
        %1324 = vmatpush1.msra.mxu0 0.0
        %1325 = vmatprep.subr.mxu0 0.0
        %1326 = vmatpush1.msra.mxu0 0.0
        %1327 = vmatprep.subr.mxu0 0.0
        %1328 = vmatpush1.msra.mxu0 0.0
        %1329 = vmatprep.subr.mxu0 0.0
        %1330 = vmatpush1.msra.mxu0 0.0
        %1331 = vmatprep.mubr.f32.mxu0 0.0
        %1332 = vmatmul.mubr.f32.gmra.mrb[0].mxu0 %v1265
        %v1333 = vpop.f32.mrb[0].mxu0
        %v1334 = vadd.f32 %v563, %v1333
        %v1335 = vpop.f32.mrb[0].mxu0
        %1336 = vdwg.mxu0
        %1338 = vrot.lane.b32.xlu0 %v1261, 48
        %v1339 = vpop.permute.xlu0 %1338
        %v1340 = vsel %vm565, %v1339, 0
        %1342 = vmatprep.subr.mxu0 0.0
        %1343 = vmatpush1.msra.mxu0 %v555
        %1344 = vmatprep.subr.mxu0 0.0
        %1345 = vmatpush1.msra.mxu0 %v556
        %1346 = vmatprep.subr.mxu0 0.0
        %1347 = vmatpush1.msra.mxu0 0.0
        %1348 = vmatprep.subr.mxu0 0.0
        %1349 = vmatpush1.msra.mxu0 0.0
        %1350 = vmatprep.subr.mxu0 0.0
        %1351 = vmatpush1.msra.mxu0 0.0
        %1352 = vmatprep.subr.mxu0 0.0
        %1353 = vmatpush1.msra.mxu0 0.0
        %1354 = vmatprep.subr.mxu0 0.0
        %1355 = vmatpush1.msra.mxu0 0.0
        %1356 = vmatprep.subr.mxu0 0.0
        %1357 = vmatpush1.msra.mxu0 0.0
        %1358 = vmatprep.subr.mxu0 0.0
        %1359 = vmatpush1.msra.mxu0 0.0
        %1360 = vmatprep.subr.mxu0 0.0
        %1361 = vmatpush1.msra.mxu0 0.0
        %1362 = vmatprep.subr.mxu0 0.0
        %1363 = vmatpush1.msra.mxu0 0.0
        %1364 = vmatprep.subr.mxu0 0.0
        %1365 = vmatpush1.msra.mxu0 0.0
        %1366 = vmatprep.subr.mxu0 0.0
        %1367 = vmatpush1.msra.mxu0 0.0
        %1368 = vmatprep.subr.mxu0 0.0
        %1369 = vmatpush1.msra.mxu0 0.0
        %1370 = vmatprep.subr.mxu0 0.0
        %1371 = vmatpush1.msra.mxu0 0.0
        %1372 = vmatprep.subr.mxu0 0.0
        %1373 = vmatpush1.msra.mxu0 0.0
        %1374 = vmatprep.subr.mxu0 0.0
        %1375 = vmatpush1.msra.mxu0 0.0
        %1376 = vmatprep.subr.mxu0 0.0
        %1377 = vmatpush1.msra.mxu0 0.0
        %1378 = vmatprep.subr.mxu0 0.0
        %1379 = vmatpush1.msra.mxu0 0.0
        %1380 = vmatprep.subr.mxu0 0.0
        %1381 = vmatpush1.msra.mxu0 0.0
        %1382 = vmatprep.subr.mxu0 0.0
        %1383 = vmatpush1.msra.mxu0 0.0
        %1384 = vmatprep.subr.mxu0 0.0
        %1385 = vmatpush1.msra.mxu0 0.0
        %1386 = vmatprep.subr.mxu0 0.0
        %1387 = vmatpush1.msra.mxu0 0.0
        %1388 = vmatprep.subr.mxu0 0.0
        %1389 = vmatpush1.msra.mxu0 0.0
        %1390 = vmatprep.subr.mxu0 0.0
        %1391 = vmatpush1.msra.mxu0 0.0
        %1392 = vmatprep.subr.mxu0 0.0
        %1393 = vmatpush1.msra.mxu0 0.0
        %1394 = vmatprep.subr.mxu0 0.0
        %1395 = vmatpush1.msra.mxu0 0.0
        %1396 = vmatprep.subr.mxu0 0.0
        %1397 = vmatpush1.msra.mxu0 0.0
        %1398 = vmatprep.subr.mxu0 0.0
        %1399 = vmatpush1.msra.mxu0 0.0
        %1400 = vmatprep.subr.mxu0 0.0
        %1401 = vmatpush1.msra.mxu0 0.0
        %1402 = vmatprep.subr.mxu0 0.0
        %1403 = vmatpush1.msra.mxu0 0.0
        %1404 = vmatprep.subr.mxu0 0.0
        %1405 = vmatpush1.msra.mxu0 0.0
        %1406 = vmatprep.mubr.f32.mxu0 0.0
        %1407 = vmatmul.mubr.f32.gmra.mrb[0].mxu0 %v1340
        %v1408 = vpop.f32.mrb[0].mxu0
        %v1409 = vadd.f32 %v643, %v1408
        %v1410 = vpop.f32.mrb[0].mxu0
        %1411 = vdwg.mxu0
        %v1412 = vadd.f32 %v539, %v1334
        %v1413 = vxor.u32 %v1412, 2147483648
        %v1414 = vmul.f32 %v1413, 1.442695
        %v1415 = vpow.pop %v1414
        %v1416 = vadd.f32 %v1415, 1.0
        %v1417 = vrcp.pop %v1416
        %v1418 = vmul.f32 1.0, %v1417
        %1420 = vrot.lane.b32.xlu0 %v1334, 96
        %v1421 = vpop.permute.xlu0 %1420
        %v1423 = vmul.f32 %v1418, %v1421
        %1425 = vrot.lane.b32.xlu0 %v1423, 32
        %v1426 = vpop.permute.xlu0 %1425
        %v1428 = vadd.f32 %v539, %v1426
        %v1429 = vtanh.pop %v1428
        %v1430 = vsub.f32 %v1218, %v1429
        %1432 = vrot.lane.b32.xlu0 %v1430, 112
        %v1433 = vpop.permute.xlu0 %1432
        %v1435 = vmul.f32 %v1418, %v1433
        %1437 = vrot.lane.b32.xlu0 %v1435, 16
        %v1438 = vpop.permute.xlu0 %1437
        %v1440 = vadd.f32 %v1429, %v1438
        %v1441 = vsub.f32 %v1440, %v1218
        %v1442 = vmul.f32 %v1258, %v1441
        %v1443 = vadd.f32 %v1218, %v1442
        %1445 = vrot.lane.b32.xlu0 %v1409, 48
        %v1446 = vpop.permute.xlu0 %1445
        %v1448 = vadd.f32 %v534, %v1446
        %v1449 = vxor.u32 %v1448, 2147483648
        %v1450 = vmul.f32 %v1449, 1.442695
        %v1451 = vpow.pop %v1450
        %v1452 = vadd.f32 %v1451, 1.0
        %v1453 = vrcp.pop %v1452
        %v1454 = vmul.f32 1.0, %v1453
        %1455 = vrot.lane.b32.xlu0 %v1409, 16
        %v1456 = vpop.permute.xlu0 %1455
        %v1458 = vmul.f32 %v1454, %v1456
        %1460 = vrot.lane.b32.xlu0 %v1458, 32
        %v1461 = vpop.permute.xlu0 %1460
        %v1463 = vadd.f32 %v534, %v1461
        %v1464 = vtanh.pop %v1463
        %v1465 = vsub.f32 %v1261, %v1464
        %1467 = vrot.lane.b32.xlu0 %v1465, 112
        %v1468 = vpop.permute.xlu0 %1467
        %v1470 = vmul.f32 %v1454, %v1468
        %1472 = vrot.lane.b32.xlu0 %v1470, 16
        %v1473 = vpop.permute.xlu0 %1472
        %v1475 = vadd.f32 %v1464, %v1473
        %v1476 = vsub.f32 %v1475, %v1261
        %v1477 = vmul.f32 %v1215, %v1476
        %v1478 = vadd.f32 %v1261, %v1477
        %1480 = vrot.lane.b32.xlu0 %v1443, 96
        %v1481 = vpop.permute.xlu0 %1480
        %v1482 = vsel %vm565, %v1481, 0
        %1484 = vmatprep.subr.mxu0 0.0
        %1485 = vmatpush1.msra.mxu0 %v553
        %1486 = vmatprep.subr.mxu0 0.0
        %1487 = vmatpush1.msra.mxu0 %v554
        %1488 = vmatprep.subr.mxu0 0.0
        %1489 = vmatpush1.msra.mxu0 0.0
        %1490 = vmatprep.subr.mxu0 0.0
        %1491 = vmatpush1.msra.mxu0 0.0
        %1492 = vmatprep.subr.mxu0 0.0
        %1493 = vmatpush1.msra.mxu0 0.0
        %1494 = vmatprep.subr.mxu0 0.0
        %1495 = vmatpush1.msra.mxu0 0.0
        %1496 = vmatprep.subr.mxu0 0.0
        %1497 = vmatpush1.msra.mxu0 0.0
        %1498 = vmatprep.subr.mxu0 0.0
        %1499 = vmatpush1.msra.mxu0 0.0
        %1500 = vmatprep.subr.mxu0 0.0
        %1501 = vmatpush1.msra.mxu0 0.0
        %1502 = vmatprep.subr.mxu0 0.0
        %1503 = vmatpush1.msra.mxu0 0.0
        %1504 = vmatprep.subr.mxu0 0.0
        %1505 = vmatpush1.msra.mxu0 0.0
        %1506 = vmatprep.subr.mxu0 0.0
        %1507 = vmatpush1.msra.mxu0 0.0
        %1508 = vmatprep.subr.mxu0 0.0
        %1509 = vmatpush1.msra.mxu0 0.0
        %1510 = vmatprep.subr.mxu0 0.0
        %1511 = vmatpush1.msra.mxu0 0.0
        %1512 = vmatprep.subr.mxu0 0.0
        %1513 = vmatpush1.msra.mxu0 0.0
        %1514 = vmatprep.subr.mxu0 0.0
        %1515 = vmatpush1.msra.mxu0 0.0
        %1516 = vmatprep.subr.mxu0 0.0
        %1517 = vmatpush1.msra.mxu0 0.0
        %1518 = vmatprep.subr.mxu0 0.0
        %1519 = vmatpush1.msra.mxu0 0.0
        %1520 = vmatprep.subr.mxu0 0.0
        %1521 = vmatpush1.msra.mxu0 0.0
        %1522 = vmatprep.subr.mxu0 0.0
        %1523 = vmatpush1.msra.mxu0 0.0
        %1524 = vmatprep.subr.mxu0 0.0
        %1525 = vmatpush1.msra.mxu0 0.0
        %1526 = vmatprep.subr.mxu0 0.0
        %1527 = vmatpush1.msra.mxu0 0.0
        %1528 = vmatprep.subr.mxu0 0.0
        %1529 = vmatpush1.msra.mxu0 0.0
        %1530 = vmatprep.subr.mxu0 0.0
        %1531 = vmatpush1.msra.mxu0 0.0
        %1532 = vmatprep.subr.mxu0 0.0
        %1533 = vmatpush1.msra.mxu0 0.0
        %1534 = vmatprep.subr.mxu0 0.0
        %1535 = vmatpush1.msra.mxu0 0.0
        %1536 = vmatprep.subr.mxu0 0.0
        %1537 = vmatpush1.msra.mxu0 0.0
        %1538 = vmatprep.subr.mxu0 0.0
        %1539 = vmatpush1.msra.mxu0 0.0
        %1540 = vmatprep.subr.mxu0 0.0
        %1541 = vmatpush1.msra.mxu0 0.0
        %1542 = vmatprep.subr.mxu0 0.0
        %1543 = vmatpush1.msra.mxu0 0.0
        %1544 = vmatprep.subr.mxu0 0.0
        %1545 = vmatpush1.msra.mxu0 0.0
        %1546 = vmatprep.subr.mxu0 0.0
        %1547 = vmatpush1.msra.mxu0 0.0
        %1548 = vmatprep.mubr.f32.mxu0 0.0
        %1549 = vmatmul.mubr.f32.gmra.mrb[0].mxu0 %v1482
        %v1550 = vpop.f32.mrb[0].mxu0
        %v1551 = vadd.f32 %v563, %v1550
        %v1552 = vpop.f32.mrb[0].mxu0
        %1553 = vdwg.mxu0
        %1555 = vrot.lane.b32.xlu0 %v1478, 48
        %v1556 = vpop.permute.xlu0 %1555
        %v1557 = vsel %vm565, %v1556, 0
        %1559 = vmatprep.subr.mxu0 0.0
        %1560 = vmatpush1.msra.mxu0 %v555
        %1561 = vmatprep.subr.mxu0 0.0
        %1562 = vmatpush1.msra.mxu0 %v556
        %1563 = vmatprep.subr.mxu0 0.0
        %1564 = vmatpush1.msra.mxu0 0.0
        %1565 = vmatprep.subr.mxu0 0.0
        %1566 = vmatpush1.msra.mxu0 0.0
        %1567 = vmatprep.subr.mxu0 0.0
        %1568 = vmatpush1.msra.mxu0 0.0
        %1569 = vmatprep.subr.mxu0 0.0
        %1570 = vmatpush1.msra.mxu0 0.0
        %1571 = vmatprep.subr.mxu0 0.0
        %1572 = vmatpush1.msra.mxu0 0.0
        %1573 = vmatprep.subr.mxu0 0.0
        %1574 = vmatpush1.msra.mxu0 0.0
        %1575 = vmatprep.subr.mxu0 0.0
        %1576 = vmatpush1.msra.mxu0 0.0
        %1577 = vmatprep.subr.mxu0 0.0
        %1578 = vmatpush1.msra.mxu0 0.0
        %1579 = vmatprep.subr.mxu0 0.0
        %1580 = vmatpush1.msra.mxu0 0.0
        %1581 = vmatprep.subr.mxu0 0.0
        %1582 = vmatpush1.msra.mxu0 0.0
        %1583 = vmatprep.subr.mxu0 0.0
        %1584 = vmatpush1.msra.mxu0 0.0
        %1585 = vmatprep.subr.mxu0 0.0
        %1586 = vmatpush1.msra.mxu0 0.0
        %1587 = vmatprep.subr.mxu0 0.0
        %1588 = vmatpush1.msra.mxu0 0.0
        %1589 = vmatprep.subr.mxu0 0.0
        %1590 = vmatpush1.msra.mxu0 0.0
        %1591 = vmatprep.subr.mxu0 0.0
        %1592 = vmatpush1.msra.mxu0 0.0
        %1593 = vmatprep.subr.mxu0 0.0
        %1594 = vmatpush1.msra.mxu0 0.0
        %1595 = vmatprep.subr.mxu0 0.0
        %1596 = vmatpush1.msra.mxu0 0.0
        %1597 = vmatprep.subr.mxu0 0.0
        %1598 = vmatpush1.msra.mxu0 0.0
        %1599 = vmatprep.subr.mxu0 0.0
        %1600 = vmatpush1.msra.mxu0 0.0
        %1601 = vmatprep.subr.mxu0 0.0
        %1602 = vmatpush1.msra.mxu0 0.0
        %1603 = vmatprep.subr.mxu0 0.0
        %1604 = vmatpush1.msra.mxu0 0.0
        %1605 = vmatprep.subr.mxu0 0.0
        %1606 = vmatpush1.msra.mxu0 0.0
        %1607 = vmatprep.subr.mxu0 0.0
        %1608 = vmatpush1.msra.mxu0 0.0
        %1609 = vmatprep.subr.mxu0 0.0
        %1610 = vmatpush1.msra.mxu0 0.0
        %1611 = vmatprep.subr.mxu0 0.0
        %1612 = vmatpush1.msra.mxu0 0.0
        %1613 = vmatprep.subr.mxu0 0.0
        %1614 = vmatpush1.msra.mxu0 0.0
        %1615 = vmatprep.subr.mxu0 0.0
        %1616 = vmatpush1.msra.mxu0 0.0
        %1617 = vmatprep.subr.mxu0 0.0
        %1618 = vmatpush1.msra.mxu0 0.0
        %1619 = vmatprep.subr.mxu0 0.0
        %1620 = vmatpush1.msra.mxu0 0.0
        %1621 = vmatprep.subr.mxu0 0.0
        %1622 = vmatpush1.msra.mxu0 0.0
        %1623 = vmatprep.mubr.f32.mxu0 0.0
        %1624 = vmatmul.mubr.f32.gmra.mrb[0].mxu0 %v1557
        %v1625 = vpop.f32.mrb[0].mxu0
        %v1626 = vadd.f32 %v643, %v1625
        %v1627 = vpop.f32.mrb[0].mxu0
        %1628 = vdwg.mxu0
        %v1629 = vadd.f32 %v544, %v1551
        %v1630 = vxor.u32 %v1629, 2147483648
        %v1631 = vmul.f32 %v1630, 1.442695
        %v1632 = vpow.pop %v1631
        %v1633 = vadd.f32 %v1632, 1.0
        %v1634 = vrcp.pop %v1633
        %v1635 = vmul.f32 1.0, %v1634
        %1637 = vrot.lane.b32.xlu0 %v1551, 96
        %v1638 = vpop.permute.xlu0 %1637
        %v1640 = vmul.f32 %v1635, %v1638
        %1642 = vrot.lane.b32.xlu0 %v1640, 32
        %v1643 = vpop.permute.xlu0 %1642
        %v1645 = vadd.f32 %v544, %v1643
        %v1646 = vtanh.pop %v1645
        %v1647 = vsub.f32 %v1443, %v1646
        %1649 = vrot.lane.b32.xlu0 %v1647, 112
        %v1650 = vpop.permute.xlu0 %1649
        %v1652 = vmul.f32 %v1635, %v1650
        %1654 = vrot.lane.b32.xlu0 %v1652, 16
        %v1655 = vpop.permute.xlu0 %1654
        %v1657 = vadd.f32 %v1646, %v1655
        %v1658 = vsub.f32 %v1657, %v1443
        %v1659 = vmul.f32 %v1025, %v1658
        %v1660 = vadd.f32 %v1443, %v1659
        %1662 = vrot.lane.b32.xlu0 %v1626, 48
        %v1663 = vpop.permute.xlu0 %1662
        %v1665 = vadd.f32 %v529, %v1663
        %v1666 = vxor.u32 %v1665, 2147483648
        %v1667 = vmul.f32 %v1666, 1.442695
        %v1668 = vpow.pop %v1667
        %v1669 = vadd.f32 %v1668, 1.0
        %v1670 = vrcp.pop %v1669
        %v1671 = vmul.f32 1.0, %v1670
        %1672 = vrot.lane.b32.xlu0 %v1626, 16
        %v1673 = vpop.permute.xlu0 %1672
        %v1675 = vmul.f32 %v1671, %v1673
        %1677 = vrot.lane.b32.xlu0 %v1675, 32
        %v1678 = vpop.permute.xlu0 %1677
        %v1680 = vadd.f32 %v529, %v1678
        %v1681 = vtanh.pop %v1680
        %v1682 = vsub.f32 %v1478, %v1681
        %1684 = vrot.lane.b32.xlu0 %v1682, 112
        %v1685 = vpop.permute.xlu0 %1684
        %v1687 = vmul.f32 %v1671, %v1685
        %1689 = vrot.lane.b32.xlu0 %v1687, 16
        %v1690 = vpop.permute.xlu0 %1689
        %v1692 = vadd.f32 %v1681, %v1690
        %v1693 = vsub.f32 %v1692, %v1478
        %v1694 = vmul.f32 %v982, %v1693
        %v1695 = vadd.f32 %v1478, %v1694
        %1697 = vrot.lane.b32.xlu0 %v1660, 96
        %v1698 = vpop.permute.xlu0 %1697
        %v1699 = vsel %vm565, %v1698, 0
        %1701 = vmatprep.subr.mxu0 0.0
        %1702 = vmatpush1.msra.mxu0 %v553
        %1703 = vmatprep.subr.mxu0 0.0
        %1704 = vmatpush1.msra.mxu0 %v554
        %1705 = vmatprep.subr.mxu0 0.0
        %1706 = vmatpush1.msra.mxu0 0.0
        %1707 = vmatprep.subr.mxu0 0.0
        %1708 = vmatpush1.msra.mxu0 0.0
        %1709 = vmatprep.subr.mxu0 0.0
        %1710 = vmatpush1.msra.mxu0 0.0
        %1711 = vmatprep.subr.mxu0 0.0
        %1712 = vmatpush1.msra.mxu0 0.0
        %1713 = vmatprep.subr.mxu0 0.0
        %1714 = vmatpush1.msra.mxu0 0.0
        %1715 = vmatprep.subr.mxu0 0.0
        %1716 = vmatpush1.msra.mxu0 0.0
        %1717 = vmatprep.subr.mxu0 0.0
        %1718 = vmatpush1.msra.mxu0 0.0
        %1719 = vmatprep.subr.mxu0 0.0
        %1720 = vmatpush1.msra.mxu0 0.0
        %1721 = vmatprep.subr.mxu0 0.0
        %1722 = vmatpush1.msra.mxu0 0.0
        %1723 = vmatprep.subr.mxu0 0.0
        %1724 = vmatpush1.msra.mxu0 0.0
        %1725 = vmatprep.subr.mxu0 0.0
        %1726 = vmatpush1.msra.mxu0 0.0
        %1727 = vmatprep.subr.mxu0 0.0
        %1728 = vmatpush1.msra.mxu0 0.0
        %1729 = vmatprep.subr.mxu0 0.0
        %1730 = vmatpush1.msra.mxu0 0.0
        %1731 = vmatprep.subr.mxu0 0.0
        %1732 = vmatpush1.msra.mxu0 0.0
        %1733 = vmatprep.subr.mxu0 0.0
        %1734 = vmatpush1.msra.mxu0 0.0
        %1735 = vmatprep.subr.mxu0 0.0
        %1736 = vmatpush1.msra.mxu0 0.0
        %1737 = vmatprep.subr.mxu0 0.0
        %1738 = vmatpush1.msra.mxu0 0.0
        %1739 = vmatprep.subr.mxu0 0.0
        %1740 = vmatpush1.msra.mxu0 0.0
        %1741 = vmatprep.subr.mxu0 0.0
        %1742 = vmatpush1.msra.mxu0 0.0
        %1743 = vmatprep.subr.mxu0 0.0
        %1744 = vmatpush1.msra.mxu0 0.0
        %1745 = vmatprep.subr.mxu0 0.0
        %1746 = vmatpush1.msra.mxu0 0.0
        %1747 = vmatprep.subr.mxu0 0.0
        %1748 = vmatpush1.msra.mxu0 0.0
        %1749 = vmatprep.subr.mxu0 0.0
        %1750 = vmatpush1.msra.mxu0 0.0
        %1751 = vmatprep.subr.mxu0 0.0
        %1752 = vmatpush1.msra.mxu0 0.0
        %1753 = vmatprep.subr.mxu0 0.0
        %1754 = vmatpush1.msra.mxu0 0.0
        %1755 = vmatprep.subr.mxu0 0.0
        %1756 = vmatpush1.msra.mxu0 0.0
        %1757 = vmatprep.subr.mxu0 0.0
        %1758 = vmatpush1.msra.mxu0 0.0
        %1759 = vmatprep.subr.mxu0 0.0
        %1760 = vmatpush1.msra.mxu0 0.0
        %1761 = vmatprep.subr.mxu0 0.0
        %1762 = vmatpush1.msra.mxu0 0.0
        %1763 = vmatprep.subr.mxu0 0.0
        %1764 = vmatpush1.msra.mxu0 0.0
        %1765 = vmatprep.mubr.f32.mxu0 0.0
        %1766 = vmatmul.mubr.f32.gmra.mrb[0].mxu0 %v1699
        %v1767 = vpop.f32.mrb[0].mxu0
        %v1768 = vadd.f32 %v563, %v1767
        %v1769 = vpop.f32.mrb[0].mxu0
        %1770 = vdwg.mxu0
        %1772 = vrot.lane.b32.xlu0 %v1695, 48
        %v1773 = vpop.permute.xlu0 %1772
        %v1774 = vsel %vm565, %v1773, 0
        %1776 = vmatprep.subr.mxu0 0.0
        %1777 = vmatpush1.msra.mxu0 %v555
        %1778 = vmatprep.subr.mxu0 0.0
        %1779 = vmatpush1.msra.mxu0 %v556
        %1780 = vmatprep.subr.mxu0 0.0
        %1781 = vmatpush1.msra.mxu0 0.0
        %1782 = vmatprep.subr.mxu0 0.0
        %1783 = vmatpush1.msra.mxu0 0.0
        %1784 = vmatprep.subr.mxu0 0.0
        %1785 = vmatpush1.msra.mxu0 0.0
        %1786 = vmatprep.subr.mxu0 0.0
        %1787 = vmatpush1.msra.mxu0 0.0
        %1788 = vmatprep.subr.mxu0 0.0
        %1789 = vmatpush1.msra.mxu0 0.0
        %1790 = vmatprep.subr.mxu0 0.0
        %1791 = vmatpush1.msra.mxu0 0.0
        %1792 = vmatprep.subr.mxu0 0.0
        %1793 = vmatpush1.msra.mxu0 0.0
        %1794 = vmatprep.subr.mxu0 0.0
        %1795 = vmatpush1.msra.mxu0 0.0
        %1796 = vmatprep.subr.mxu0 0.0
        %1797 = vmatpush1.msra.mxu0 0.0
        %1798 = vmatprep.subr.mxu0 0.0
        %1799 = vmatpush1.msra.mxu0 0.0
        %1800 = vmatprep.subr.mxu0 0.0
        %1801 = vmatpush1.msra.mxu0 0.0
        %1802 = vmatprep.subr.mxu0 0.0
        %1803 = vmatpush1.msra.mxu0 0.0
        %1804 = vmatprep.subr.mxu0 0.0
        %1805 = vmatpush1.msra.mxu0 0.0
        %1806 = vmatprep.subr.mxu0 0.0
        %1807 = vmatpush1.msra.mxu0 0.0
        %1808 = vmatprep.subr.mxu0 0.0
        %1809 = vmatpush1.msra.mxu0 0.0
        %1810 = vmatprep.subr.mxu0 0.0
        %1811 = vmatpush1.msra.mxu0 0.0
        %1812 = vmatprep.subr.mxu0 0.0
        %1813 = vmatpush1.msra.mxu0 0.0
        %1814 = vmatprep.subr.mxu0 0.0
        %1815 = vmatpush1.msra.mxu0 0.0
        %1816 = vmatprep.subr.mxu0 0.0
        %1817 = vmatpush1.msra.mxu0 0.0
        %1818 = vmatprep.subr.mxu0 0.0
        %1819 = vmatpush1.msra.mxu0 0.0
        %1820 = vmatprep.subr.mxu0 0.0
        %1821 = vmatpush1.msra.mxu0 0.0
        %1822 = vmatprep.subr.mxu0 0.0
        %1823 = vmatpush1.msra.mxu0 0.0
        %1824 = vmatprep.subr.mxu0 0.0
        %1825 = vmatpush1.msra.mxu0 0.0
        %1826 = vmatprep.subr.mxu0 0.0
        %1827 = vmatpush1.msra.mxu0 0.0
        %1828 = vmatprep.subr.mxu0 0.0
        %1829 = vmatpush1.msra.mxu0 0.0
        %1830 = vmatprep.subr.mxu0 0.0
        %1831 = vmatpush1.msra.mxu0 0.0
        %1832 = vmatprep.subr.mxu0 0.0
        %1833 = vmatpush1.msra.mxu0 0.0
        %1834 = vmatprep.subr.mxu0 0.0
        %1835 = vmatpush1.msra.mxu0 0.0
        %1836 = vmatprep.subr.mxu0 0.0
        %1837 = vmatpush1.msra.mxu0 0.0
        %1838 = vmatprep.subr.mxu0 0.0
        %1839 = vmatpush1.msra.mxu0 0.0
        %1840 = vmatprep.mubr.f32.mxu0 0.0
        %1841 = vmatmul.mubr.f32.gmra.mrb[0].mxu0 %v1774
        %v1842 = vpop.f32.mrb[0].mxu0
        %v1843 = vadd.f32 %v643, %v1842
        %v1844 = vpop.f32.mrb[0].mxu0
        %1845 = vdwg.mxu0
        %v1846 = vadd.f32 %v549, %v1768
        %v1847 = vxor.u32 %v1846, 2147483648
        %v1848 = vmul.f32 %v1847, 1.442695
        %v1849 = vpow.pop %v1848
        %v1850 = vadd.f32 %v1849, 1.0
        %v1851 = vrcp.pop %v1850
        %v1852 = vmul.f32 1.0, %v1851
        %1854 = vrot.lane.b32.xlu0 %v1768, 96
        %v1855 = vpop.permute.xlu0 %1854
        %v1857 = vmul.f32 %v1852, %v1855
        %1859 = vrot.lane.b32.xlu0 %v1857, 32
        %v1860 = vpop.permute.xlu0 %1859
        %v1862 = vadd.f32 %v549, %v1860
        %v1863 = vtanh.pop %v1862
        %v1864 = vsub.f32 %v1660, %v1863
        %1866 = vrot.lane.b32.xlu0 %v1864, 112
        %v1867 = vpop.permute.xlu0 %1866
        %v1869 = vmul.f32 %v1852, %v1867
        %1871 = vrot.lane.b32.xlu0 %v1869, 16
        %v1872 = vpop.permute.xlu0 %1871
        %v1874 = vadd.f32 %v1863, %v1872
        %v1875 = vsub.f32 %v1874, %v1660
        %v1876 = vmul.f32 %v792, %v1875
        %v1877 = vadd.f32 %v1660, %v1876
        %1879 = vrot.lane.b32.xlu0 %v1843, 48
        %v1880 = vpop.permute.xlu0 %1879
        %v1882 = vadd.f32 %v524, %v1880
        %v1883 = vxor.u32 %v1882, 2147483648
        %v1884 = vmul.f32 %v1883, 1.442695
        %v1885 = vpow.pop %v1884
        %v1886 = vadd.f32 %v1885, 1.0
        %v1887 = vrcp.pop %v1886
        %v1888 = vmul.f32 1.0, %v1887
        %1889 = vrot.lane.b32.xlu0 %v1843, 16
        %v1890 = vpop.permute.xlu0 %1889
        %v1892 = vmul.f32 %v1888, %v1890
        %1894 = vrot.lane.b32.xlu0 %v1892, 32
        %v1895 = vpop.permute.xlu0 %1894
        %v1897 = vadd.f32 %v524, %v1895
        %v1898 = vtanh.pop %v1897
        %v1899 = vsub.f32 %v1695, %v1898
        %1901 = vrot.lane.b32.xlu0 %v1899, 112
        %v1902 = vpop.permute.xlu0 %1901
        %v1904 = vmul.f32 %v1888, %v1902
        %1906 = vrot.lane.b32.xlu0 %v1904, 16
        %v1907 = vpop.permute.xlu0 %1906
        %v1909 = vadd.f32 %v1898, %v1907
        %v1910 = vsub.f32 %v1909, %v1695
        %v1911 = vmul.f32 %v750, %v1910
        %v1912 = vadd.f32 %v1695, %v1911
        %v1913 = vld [vmem:[%s423] sm:$0xff]
        %1915 = vrot.lane.b32.xlu0 %v1877, 96
        %v1916 = vpop.permute.xlu0 %1915
        %1919 = vrot.lane.b32.xlu0 %v1912, 64
        %v1920 = vpop.permute.xlu0 %1919
        %v1922 = vsel %vm565, %v1916, %v1920
        %vm1923 = vcmask 261120
        %v1924 = vsel %vm1923, %v1922, 0.0
        %1926 = vset.pattern.permute.xlu0 0
        %1927 = vperm.xlu0 %1926, %v1913
        %v1928 = vpop.permute.xlu0 %1927
        %v1930 = vmul.f32 %v1924, %v1928
        %1931 = vst [vmem:[%s409] sm:$0xff] %v1930
        %s1932 = sand.u32 %s258, 1
        %s1933 = scalar_lea.sflag [#allocation4], %s1932
        %s1934 = sand.u32 %s258, 1
        %s1935 = smul.addr %s1934, 8
        %s1936 = scalar_lea.vmem [#allocation5], %s1935
        // Predicated region
        $region61: #{tpu_custom_call.1} parent=55 // pred_check
          %p1937 = pneg %p268
        $region62: #{tpu_custom_call.1} parent=55 // pred_check_branch
          %1939 = sbr.rel (%p1937) target = $region64
        $region63: #{tpu_custom_call.1} parent=55 // pred_region
          %s1941 = ssub.s32 128, 128
          %1942 = vsyncadd %s1933, %s1941
          %s1943 = sadd.s32 %s31, %s30
          %s1944 = smul.addr %s1943, 128
          %s1945 = scalar_lea.hbm %s9, %s1944
          %s1947 = sshll.u32 %s1936, 4
          %s1948 = int_to_ptr.vmem [resolvable:$true] %s1947
          %1950 = dma.vmem_to_hbm [thread:$0]  %s1948, 128, %s1945, %s1933
        $region64: #{tpu_custom_call.1} parent=55 // pred_fallthru
          _
      $region56: #{tpu_custom_call.1} parent=5 // pred_fallthru
        _
      %p1951 = scmp.le.s32.totalorder 2, %s21
      // Predicated region
      $region65: #{tpu_custom_call.1} parent=5 // pred_check
        %p1952 = pneg %p1951
      $region66: #{tpu_custom_call.1} parent=5 // pred_check_branch
        %1954 = sbr.rel (%p1952) target = $region68
      $region67: #{tpu_custom_call.1} parent=5 // pred_region
        %s1955 = ssub.s32 %s21, 2
        // Predicated region
        $region69: #{tpu_custom_call.1} parent=67 // pred_check
          %p1956 = pneg %p274
        $region70: #{tpu_custom_call.1} parent=67 // pred_check_branch
          %1958 = sbr.rel (%p1956) target = $region72
        $region71: #{tpu_custom_call.1} parent=67 // pred_region
          %s1959 = sand.u32 %s259, 1
          %s1960 = scalar_lea.sflag [#allocation4], %s1959
          %s1961 = sand.u32 %s259, 1
          %s1962 = smul.addr %s1961, 8
          %s1963 = scalar_lea.vmem [#allocation5], %s1962
          %1964 = dma.done %s1960, 128
        $region72: #{tpu_custom_call.1} parent=67 // pred_fallthru
          _
      $region68: #{tpu_custom_call.1} parent=5 // pred_fallthru
        _
    $region6: #{tpu_custom_call.1} parent=1 // loop_footer
      %s25 = sadd.s32 1, %s21
    $region7: #{tpu_custom_call.1} parent=1 // loop_footer_branch
      %20 = sbr.rel target = $region3
    $region8: #{tpu_custom_call.1} parent=1 // loop_exit
      _
    %1965 = vsyncpa [#allocation3], 1
    %s1966 = scalar_lea.sflag [#allocation3], 1
    %1967 = vsyncpa %s1966, 1
    %1968 = vsyncpa [#allocation4], 1
    %s1969 = scalar_lea.sflag [#allocation4], 1
    %1970 = vsyncpa %s1969, 1

</llo_original>
